<compile_context>
chip_gen: v7x
topology: tpu7x:2x2x1
jax: 0.10.0
libtpu: 0.0.40
codegen_flags: <defaults>
</compile_context>

<pallas_src>
import jax
import jax.numpy as jnp
from jax import lax
from jax.experimental import pallas as pl
from jax.experimental.pallas import tpu as pltpu


def _svgpvae_fused_kernel(scal_ref, x_ref, t_col_ref, t_row_ref, z_col_ref,
                          z_row_ref, ew1_ref, eb1_ref, ewh_ref, ebh_ref,
                          dw1_ref, db1_ref, dw2_ref, db2_ref, eps_ref,
                          mu_out_ref, var_out_ref, recon_ref):
    f32 = jnp.float32
    # ---- GP hyperparameters from SMEM (trainable runtime data) ----
    ls = scal_ref[0]          # RBF lengthscale
    kvar = scal_ref[1]        # RBF variance (== k(t, t) on the diagonal)
    scale = scal_ref[2]       # N_train / batch_size
    jitter = scal_ref[3]
    inv_ls2 = 1.0 / (ls * ls)

    num_lat = ewh_ref.shape[1] // 2
    num_samples = eps_ref.shape[0]

    # ------------------------- encoder (MLP inference) -------------------------
    x = x_ref[...]                                                   # (B, D_in)
    h = jnp.tanh(jnp.dot(x, ew1_ref[...], preferred_element_type=f32) + eb1_ref[...])
    head = jnp.dot(h, ewh_ref[...], preferred_element_type=f32) + ebh_ref[...]
    qnet_mus = head[:, :num_lat]                                     # (B, L)
    std_pre = head[:, num_lat:]                                      # (B, L)
    # numerically stable softplus -> positive qnet_stds
    qnet_stds = jnp.maximum(std_pre, 0.0) + jnp.log(1.0 + jnp.exp(-jnp.abs(std_pre)))
    qnet_vars = qnet_stds * qnet_stds                                # (B, L)
    inv_vars = 1.0 / qnet_vars        # exact: feeds Sigma_l / mu / var
    y_tilde = qnet_mus * inv_vars                                    # (B, L)

    # ------------------- RBF kernel matrices (d = 1, outer diff) ----------------
    t_col = t_col_ref[...]                                           # (B, 1)
    t_row = t_row_ref[...]                                           # (1, B)
    z_col = z_col_ref[...]                                           # (M, 1)
    z_row = z_row_ref[...]                                           # (1, M)
    m_ind = z_col.shape[0]

    def rbf(dx):
        return kvar * jnp.exp(-0.5 * inv_ls2 * dx * dx)

    ktm = rbf(t_col - z_row)                                         # (B, M)
    kmt = rbf(z_col - t_row)                                         # (M, B) = ktm.T
    kmm = rbf(z_col - z_row)                                         # (M, M)
    rm = lax.broadcasted_iota(jnp.int32, (m_ind, m_ind), 0)
    cm = lax.broadcasted_iota(jnp.int32, (m_ind, m_ind), 1)
    kmm = jnp.where(rm == cm, kmm + jitter, kmm)                     # + jitter * I

    # --------- batched SVGP posterior: L+1 MxM systems, ONE pivot chain ---------
    # block 0      : kmm                          -> term2 (shared across latents)
    # blocks 1..L  : Sigma_l = kmm + scale * K_mt @ (K_tm * iv_l)
    iv_lb = inv_vars.T                                               # (L, B)
    y_tilde_lb = y_tilde.T                                           # (L, B)
    kmt_s = scale * kmt                                              # hoisted once
    ktm_iv = ktm[None, :, :] * iv_lb[:, :, None]                     # (L, B, M)
    kmt_s_b = jnp.broadcast_to(kmt_s[None, :, :], (num_lat,) + kmt.shape)   # (L, M, B)
    sigma_all = lax.dot_general(                                     # (L, M, M)
        kmt_s_b, ktm_iv, (((2,), (1,)), ((0,), (0,))),
        preferred_element_type=f32)
    a = jnp.concatenate([kmm[None, :, :], kmm[None, :, :] + sigma_all], axis=0)
    r = jnp.broadcast_to(kmt[None, :, :], (num_lat + 1,) + kmt.shape)  # (L+1, M, B)

    # Fully unrolled, unpivoted Gauss-Jordan on all L+1 SPD-with-jitter blocks
    # simultaneously: 8 pivot steps total instead of 8*(L+1).
    # TODO(synk): reference uses psd_safe_cholesky; unpivoted GJ on the jittered
    # SPD M x M systems is the closest clean in-kernel equivalent at M = 8.
    row_ids = lax.broadcasted_iota(jnp.int32, (m_ind, 1), 0)         # (M, 1)
    for k in range(m_ind):
        inv_piv = 1.0 / a[:, k:k + 1, k:k + 1]                       # (L+1, 1, 1)
        arow = a[:, k:k + 1, :] * inv_piv                            # (L+1, 1, M)
        rrow = r[:, k:k + 1, :] * inv_piv                            # (L+1, 1, B)
        col = a[:, :, k:k + 1]                                       # (L+1, M, 1)
        sel = row_ids == k                                           # (M, 1)
        a = jnp.where(sel, arow, a - col * arow)
        r = jnp.where(sel, rrow, r - col * rrow)

    sol_kmm = r[0]                     # (M, B)    = kmm^{-1} K_mt
    sol_sig = r[1:]                    # (L, M, B) = Sigma_l^{-1} K_mt

    # Diagonals computed directly -- no (B, B) matmuls, no identity masks.
    term2_row = jnp.sum(kmt * sol_kmm, axis=0, keepdims=True)        # (1, B)
    term3_lb = jnp.sum(kmt[None, :, :] * sol_sig, axis=1)            # (L, B)
    # mu_l = scale * K_tm Sigma_l^{-1} K_mt y~_l  -- reuse sol_sig (no g solve).
    w_lm = jnp.sum(sol_sig * y_tilde_lb[:, None, :], axis=2)         # (L, M)
    mu_lb = scale * jnp.sum(w_lm[:, :, None] * kmt[None, :, :], axis=1)   # (L, B)

    base_row = kvar - term2_row                                      # (1, B), hoisted
    var_lb = base_row + term3_lb                                     # (L, B)

    full_p_mu = mu_lb.T                                              # (B, L)
    full_p_var = var_lb.T                                            # (B, L) unclamped, as in ref
    mu_out_ref[...] = full_p_mu                                      # single full store
    var_out_ref[...] = full_p_var                                    # single full store

    # ---------------- reparameterised sampling + MLP decoder --------------------
    std_q = jnp.sqrt(jnp.clip(full_p_var, 0.0001, 1000.0))           # torch.clamp
    dw1 = dw1_ref[...]
    db1 = db1_ref[...]
    dw2 = dw2_ref[...]
    db2 = db2_ref[...]
    for s in range(num_samples):
        z_s = full_p_mu + std_q * eps_ref[s]                         # (B, L)
        hd = jnp.tanh(jnp.dot(z_s, dw1, preferred_element_type=f32) + db1)
        logits = jnp.dot(hd, dw2, preferred_element_type=f32) + db2
        e = jnp.exp(-logits)
        # exact reciprocal (EUP path) keeps bernoulli means strictly in (0, 1]
        recon_ref[s] = pl.reciprocal(1.0 + e, approx=False)


# ------------------------------ Model wrapper ------------------------------- #

def init_params(key, d_in, hidden, latent, M):
    ks = jax.random.split(key, 5)
    return {
        "enc_w1": 0.1 * jax.random.normal(ks[0], (d_in, hidden), jnp.float32),
        "enc_b1": jnp.zeros((1, hidden), jnp.float32),
        "enc_wmu": 0.1 * jax.random.normal(ks[1], (hidden, latent), jnp.float32),
        "enc_bmu": jnp.zeros((1, latent), jnp.float32),
        "enc_wstd": 0.1 * jax.random.normal(ks[2], (hidden, latent), jnp.float32),
        "enc_bstd": jnp.zeros((1, latent), jnp.float32),
        "dec_w1": 0.1 * jax.random.normal(ks[3], (latent, hidden), jnp.float32),
        "dec_b1": jnp.zeros((1, hidden), jnp.float32),
        "dec_w2": 0.1 * jax.random.normal(ks[4], (hidden, d_in), jnp.float32),
        "dec_b2": jnp.zeros((1, d_in), jnp.float32),
        "inducing": jnp.linspace(0.0, 1.0, M, dtype=jnp.float32).reshape(M, 1),
        "lengthscale": jnp.float32(0.5),
        "variance": jnp.float32(1.0),
    }


def svgpvae_forward(params, vid_batch, t_batch, *, N_train, jitter=1e-4,
                    num_samples=1, sample_key=None):
    """SVGPVAEBase.forward with cov_latent_diag=True, fused into one Pallas call."""
    B, C, H, W = vid_batch.shape
    d_in = C * H * W
    hid = params["enc_w1"].shape[1]
    L = params["enc_wmu"].shape[1]
    M = params["inducing"].shape[0]

    x_flat = vid_batch.reshape(B, d_in).astype(jnp.float32)
    t_col = t_batch.reshape(B, 1).astype(jnp.float32)
    t_row = t_col.reshape(1, B)
    z_col = params["inducing"].reshape(M, 1)
    z_row = z_col.reshape(1, M)

    # fold both encoder heads into a single (hidden, 2L) matmul
    w_head = jnp.concatenate([params["enc_wmu"], params["enc_wstd"]], axis=1)
    b_head = jnp.concatenate([params["enc_bmu"], params["enc_bstd"]], axis=1)

    # GP hyperparameters / ELBO scale as runtime SMEM scalars (trainable, no recompile)
    scalars = jnp.stack([
        jnp.asarray(params["lengthscale"], jnp.float32),
        jnp.asarray(params["variance"], jnp.float32),
        jnp.asarray(N_train, jnp.float32) / jnp.asarray(B, jnp.float32),
        jnp.asarray(jitter, jnp.float32),
    ])

    # TODO(synk): eps could be generated in-kernel via pltpu.prng_*, but the
    # explicit input preserves torch.randn-style external RNG semantics.
    eps = jax.random.normal(sample_key, (num_samples, B, L), jnp.float32)

    operands = (scalars, x_flat, t_col, t_row, z_col, z_row,
                params["enc_w1"], params["enc_b1"], w_head, b_head,
                params["dec_w1"], params["dec_b1"], params["dec_w2"],
                params["dec_b2"], eps)

    out_shape = (
        jax.ShapeDtypeStruct((B, L), jnp.float32),                   # full_p_mu
        jax.ShapeDtypeStruct((B, L), jnp.float32),                   # full_p_var
        jax.ShapeDtypeStruct((num_samples, B, d_in), jnp.float32),   # recon (flat)
    )

    # Advisory cost estimate so XLA schedules the custom call sensibly.
    flops = (2 * B * d_in * hid + 2 * B * hid * 2 * L                 # encoder
             + 2 * L * M * B * M + 3 * (L + 1) * M * M * (M + B)      # GP solves (approx)
             + num_samples * (2 * B * L * hid + 2 * B * hid * d_in))  # decoder
    transcendentals = (B * hid + B * L + 2 * B * M + M * M
                       + num_samples * (B * hid + B * d_in))
    bytes_accessed = 4 * (sum(int(o.size) for o in operands)
                          + 2 * B * L + num_samples * B * d_in)

    vmem = pl.BlockSpec(memory_space=pltpu.MemorySpace.VMEM)
    smem = pl.BlockSpec(memory_space=pltpu.MemorySpace.SMEM)
    full_p_mu, full_p_var, recon_flat = pl.pallas_call(
        _svgpvae_fused_kernel,
        in_specs=[smem] + [vmem] * 14,
        out_specs=(vmem, vmem, vmem),
        out_shape=out_shape,
        cost_estimate=pl.CostEstimate(
            flops=int(flops), transcendentals=int(transcendentals),
            bytes_accessed=int(bytes_accessed)),
    )(*operands)

    recon_imgs = recon_flat.reshape(num_samples, B, C, H, W)   # bernoulli means, NCHW
    return full_p_mu, full_p_var, recon_imgs


if __name__ == "__main__":
    key = jax.random.PRNGKey(0)
    k_param, k_data, k_eps = jax.random.split(key, 3)

    B, C, H, W = 8, 1, 16, 16      # batch of frames, NCHW
    L, M, HID = 4, 8, 32           # latent dims, inducing points, MLP hidden
    N_train = 40

    params = init_params(k_param, C * H * W, HID, L, M)
    vid_batch = jax.random.uniform(k_data, (B, C, H, W), jnp.float32)
    t_batch = jnp.linspace(0.0, 1.0, B, dtype=jnp.float32).reshape(B, 1)

    full_p_mu, full_p_var, recon = svgpvae_forward(
        params, vid_batch, t_batch, N_train=N_train, jitter=1e-4,
        num_samples=1, sample_key=k_eps)
    jax.block_until_ready((full_p_mu, full_p_var, recon))

    assert full_p_mu.shape == (B, L)
    assert full_p_var.shape == (B, L)
    assert recon.shape == (1, B, C, H, W)
    assert bool(jnp.all(jnp.isfinite(full_p_mu)))
    assert bool(jnp.all(jnp.isfinite(full_p_var)))
    assert bool(jnp.all((recon >= 0.0) & (recon <= 1.0)))
    print("KERNEL_OK")
</pallas_src>

<mosaic_0001>
module attributes {stable_mosaic.version = 11 : i64} {
  func.func @_svgpvae_fused_kernel(%arg0: memref<4xf32, #tpu.memory_space<smem>>, %arg1: memref<8x256xf32, #tpu.memory_space<vmem>>, %arg2: memref<8x1xf32, #tpu.memory_space<vmem>>, %arg3: memref<1x8xf32, #tpu.memory_space<vmem>>, %arg4: memref<8x1xf32, #tpu.memory_space<vmem>>, %arg5: memref<1x8xf32, #tpu.memory_space<vmem>>, %arg6: memref<256x32xf32, #tpu.memory_space<vmem>>, %arg7: memref<1x32xf32, #tpu.memory_space<vmem>>, %arg8: memref<32x8xf32, #tpu.memory_space<vmem>>, %arg9: memref<1x8xf32, #tpu.memory_space<vmem>>, %arg10: memref<4x32xf32, #tpu.memory_space<vmem>>, %arg11: memref<1x32xf32, #tpu.memory_space<vmem>>, %arg12: memref<32x256xf32, #tpu.memory_space<vmem>>, %arg13: memref<1x256xf32, #tpu.memory_space<vmem>>, %arg14: memref<1x8x4xf32, #tpu.memory_space<vmem>>, %arg15: memref<8x4xf32, #tpu.memory_space<vmem>>, %arg16: memref<8x4xf32, #tpu.memory_space<vmem>>, %arg17: memref<1x8x256xf32, #tpu.memory_space<vmem>>) attributes {dimension_semantics = [], scalar_prefetch = 0 : i64, scratch_operands = 0 : i64, tpu.core_type = #tpu.core_type<tc>} {
    %c0 = arith.constant 0 : index
    %0 = memref.load %arg0[%c0] : memref<4xf32, #tpu.memory_space<smem>>
    %c1 = arith.constant 1 : index
    %1 = memref.load %arg0[%c1] : memref<4xf32, #tpu.memory_space<smem>>
    %c2 = arith.constant 2 : index
    %2 = memref.load %arg0[%c2] : memref<4xf32, #tpu.memory_space<smem>>
    %c3 = arith.constant 3 : index
    %3 = memref.load %arg0[%c3] : memref<4xf32, #tpu.memory_space<smem>>
    %4 = arith.mulf %0, %0 : f32
    %cst = arith.constant 1.000000e+00 : f32
    %5 = arith.divf %cst, %4 : f32
    %c0_0 = arith.constant 0 : index
    %c0_1 = arith.constant 0 : index
    %6 = vector.load %arg1[%c0_0, %c0_1] : memref<8x256xf32, #tpu.memory_space<vmem>>, vector<8x256xf32>
    %c0_2 = arith.constant 0 : index
    %c0_3 = arith.constant 0 : index
    %7 = vector.load %arg6[%c0_2, %c0_3] : memref<256x32xf32, #tpu.memory_space<vmem>>, vector<256x32xf32>
    %cst_4 = arith.constant dense<0.000000e+00> : vector<8x32xf32>
    %8 = tpu.matmul %6, %7, %cst_4 {dimension_numbers = #tpu.dot_dimension_numbers<[1], [0], [0], [1], [0, 0, 1, 1], [], []>} : vector<8x256xf32>, vector<256x32xf32>, vector<8x32xf32> -> vector<8x32xf32>
    %c0_5 = arith.constant 0 : index
    %c0_6 = arith.constant 0 : index
    %9 = vector.load %arg7[%c0_5, %c0_6] : memref<1x32xf32, #tpu.memory_space<vmem>>, vector<1x32xf32>
    %10 = vector.broadcast %9 : vector<1x32xf32> to vector<8x32xf32>
    %11 = arith.addf %8, %10 : vector<8x32xf32>
    %12 = math.tanh %11 : vector<8x32xf32>
    %c0_7 = arith.constant 0 : index
    %c0_8 = arith.constant 0 : index
    %13 = vector.load %arg8[%c0_7, %c0_8] : memref<32x8xf32, #tpu.memory_space<vmem>>, vector<32x8xf32>
    %cst_9 = arith.constant dense<0.000000e+00> : vector<8x8xf32>
    %14 = tpu.matmul %12, %13, %cst_9 {dimension_numbers = #tpu.dot_dimension_numbers<[1], [0], [0], [1], [0, 0, 1, 1], [], []>} : vector<8x32xf32>, vector<32x8xf32>, vector<8x8xf32> -> vector<8x8xf32>
    %c0_10 = arith.constant 0 : index
    %c0_11 = arith.constant 0 : index
    %15 = vector.load %arg9[%c0_10, %c0_11] : memref<1x8xf32, #tpu.memory_space<vmem>>, vector<1x8xf32>
    %16 = vector.broadcast %15 : vector<1x8xf32> to vector<8x8xf32>
    %17 = arith.addf %14, %16 : vector<8x8xf32>
    %18 = vector.extract_strided_slice %17 {offsets = [0, 0], sizes = [8, 4], strides = [1, 1]} : vector<8x8xf32> to vector<8x4xf32>
    %19 = vector.extract_strided_slice %17 {offsets = [0, 4], sizes = [8, 4], strides = [1, 1]} : vector<8x8xf32> to vector<8x4xf32>
    %cst_12 = arith.constant 0.000000e+00 : f32
    %20 = vector.broadcast %cst_12 : f32 to vector<8x4xf32>
    %21 = arith.maximumf %19, %20 : vector<8x4xf32>
    %22 = math.absf %19 : vector<8x4xf32>
    %cst_13 = arith.constant 0.000000e+00 : f32
    %23 = vector.broadcast %cst_13 : f32 to vector<8x4xf32>
    %24 = arith.subf %23, %22 : vector<8x4xf32>
    %25 = math.exp %24 : vector<8x4xf32>
    %cst_14 = arith.constant 1.000000e+00 : f32
    %26 = vector.broadcast %cst_14 : f32 to vector<8x4xf32>
    %27 = arith.addf %26, %25 : vector<8x4xf32>
    %28 = math.log %27 : vector<8x4xf32>
    %29 = arith.addf %21, %28 : vector<8x4xf32>
    %30 = arith.mulf %29, %29 : vector<8x4xf32>
    %cst_15 = arith.constant 1.000000e+00 : f32
    %31 = vector.broadcast %cst_15 : f32 to vector<8x4xf32>
    %32 = arith.divf %31, %30 : vector<8x4xf32>
    %33 = arith.mulf %18, %32 : vector<8x4xf32>
    %c0_16 = arith.constant 0 : index
    %c0_17 = arith.constant 0 : index
    %34 = vector.load %arg2[%c0_16, %c0_17] : memref<8x1xf32, #tpu.memory_space<vmem>>, vector<8x1xf32>
    %c0_18 = arith.constant 0 : index
    %c0_19 = arith.constant 0 : index
    %35 = vector.load %arg3[%c0_18, %c0_19] : memref<1x8xf32, #tpu.memory_space<vmem>>, vector<1x8xf32>
    %c0_20 = arith.constant 0 : index
    %c0_21 = arith.constant 0 : index
    %36 = vector.load %arg4[%c0_20, %c0_21] : memref<8x1xf32, #tpu.memory_space<vmem>>, vector<8x1xf32>
    %c0_22 = arith.constant 0 : index
    %c0_23 = arith.constant 0 : index
    %37 = vector.load %arg5[%c0_22, %c0_23] : memref<1x8xf32, #tpu.memory_space<vmem>>, vector<1x8xf32>
    %38 = vector.broadcast %34 : vector<8x1xf32> to vector<8x8xf32>
    %39 = vector.broadcast %37 : vector<1x8xf32> to vector<8x8xf32>
    %40 = arith.subf %38, %39 : vector<8x8xf32>
    %cst_24 = arith.constant -5.000000e-01 : f32
    %41 = arith.mulf %cst_24, %5 : f32
    %42 = vector.broadcast %41 : f32 to vector<8x8xf32>
    %43 = arith.mulf %42, %40 : vector<8x8xf32>
    %44 = arith.mulf %43, %40 : vector<8x8xf32>
    %45 = math.exp %44 : vector<8x8xf32>
    %46 = vector.broadcast %1 : f32 to vector<8x8xf32>
    %47 = arith.mulf %46, %45 : vector<8x8xf32>
    %48 = vector.broadcast %36 : vector<8x1xf32> to vector<8x8xf32>
    %49 = vector.broadcast %35 : vector<1x8xf32> to vector<8x8xf32>
    %50 = arith.subf %48, %49 : vector<8x8xf32>
    %cst_25 = arith.constant -5.000000e-01 : f32
    %51 = arith.mulf %cst_25, %5 : f32
    %52 = vector.broadcast %51 : f32 to vector<8x8xf32>
    %53 = arith.mulf %52, %50 : vector<8x8xf32>
    %54 = arith.mulf %53, %50 : vector<8x8xf32>
    %55 = math.exp %54 : vector<8x8xf32>
    %56 = vector.broadcast %1 : f32 to vector<8x8xf32>
    %57 = arith.mulf %56, %55 : vector<8x8xf32>
    %58 = vector.broadcast %36 : vector<8x1xf32> to vector<8x8xf32>
    %59 = vector.broadcast %37 : vector<1x8xf32> to vector<8x8xf32>
    %60 = arith.subf %58, %59 : vector<8x8xf32>
    %cst_26 = arith.constant -5.000000e-01 : f32
    %61 = arith.mulf %cst_26, %5 : f32
    %62 = vector.broadcast %61 : f32 to vector<8x8xf32>
    %63 = arith.mulf %62, %60 : vector<8x8xf32>
    %64 = arith.mulf %63, %60 : vector<8x8xf32>
    %65 = math.exp %64 : vector<8x8xf32>
    %66 = vector.broadcast %1 : f32 to vector<8x8xf32>
    %67 = arith.mulf %66, %65 : vector<8x8xf32>
    %68 = tpu.iota {dimensions = array<i32: 0>} : vector<8x8xi32>
    %69 = tpu.iota {dimensions = array<i32: 1>} : vector<8x8xi32>
    %70 = arith.cmpi eq, %68, %69 : vector<8x8xi32>
    %71 = vector.broadcast %3 : f32 to vector<8x8xf32>
    %72 = arith.addf %67, %71 : vector<8x8xf32>
    %73 = arith.select %70, %72, %67 : vector<8x8xi1>, vector<8x8xf32>
    %74 = tpu.transpose %32, [1, 0] : vector<8x4xf32> -> vector<4x8xf32>
    %75 = tpu.transpose %33, [1, 0] : vector<8x4xf32> -> vector<4x8xf32>
    %76 = vector.broadcast %2 : f32 to vector<8x8xf32>
    %77 = arith.mulf %76, %57 : vector<8x8xf32>
    %78 = vector.shape_cast %47 : vector<8x8xf32> to vector<1x8x8xf32>
    %79 = vector.shape_cast %74 : vector<4x8xf32> to vector<4x8x1xf32>
    %80 = vector.broadcast %78 : vector<1x8x8xf32> to vector<4x8x8xf32>
    %81 = vector.broadcast %79 : vector<4x8x1xf32> to vector<4x8x8xf32>
    %82 = arith.mulf %80, %81 : vector<4x8x8xf32>
    %83 = vector.shape_cast %77 : vector<8x8xf32> to vector<1x8x8xf32>
    %84 = vector.shape_cast %83 : vector<1x8x8xf32> to vector<1x8x8xf32>
    %85 = vector.broadcast %84 : vector<1x8x8xf32> to vector<4x8x8xf32>
    %cst_27 = arith.constant dense<0.000000e+00> : vector<4x8x8xf32>
    %86 = tpu.matmul %85, %82, %cst_27 {dimension_numbers = #tpu.dot_dimension_numbers<[2], [1], [1], [2], [0, 0, 0, 1, 1, 2], [0], [0]>} : vector<4x8x8xf32>, vector<4x8x8xf32>, vector<4x8x8xf32> -> vector<4x8x8xf32>
    %87 = vector.shape_cast %73 : vector<8x8xf32> to vector<1x8x8xf32>
    %88 = vector.shape_cast %73 : vector<8x8xf32> to vector<1x8x8xf32>
    %89 = vector.broadcast %88 : vector<1x8x8xf32> to vector<4x8x8xf32>
    %90 = arith.addf %89, %86 : vector<4x8x8xf32>
    %91 = tpu.concatenate %87, %90 in 0 : vector<1x8x8xf32>, vector<4x8x8xf32> -> vector<5x8x8xf32>
    %92 = vector.shape_cast %57 : vector<8x8xf32> to vector<1x8x8xf32>
    %93 = vector.shape_cast %92 : vector<1x8x8xf32> to vector<1x8x8xf32>
    %94 = vector.broadcast %93 : vector<1x8x8xf32> to vector<5x8x8xf32>
    %95 = tpu.iota {dimensions = array<i32: 0>} : vector<8x1xi32>
    %96 = vector.extract_strided_slice %91 {offsets = [0, 0, 0], sizes = [5, 1, 1], strides = [1, 1, 1]} : vector<5x8x8xf32> to vector<5x1x1xf32>
    %cst_28 = arith.constant 1.000000e+00 : f32
    %97 = vector.broadcast %cst_28 : f32 to vector<5x1x1xf32>
    %98 = arith.divf %97, %96 : vector<5x1x1xf32>
    %99 = vector.extract_strided_slice %91 {offsets = [0, 0, 0], sizes = [5, 1, 8], strides = [1, 1, 1]} : vector<5x8x8xf32> to vector<5x1x8xf32>
    %100 = vector.broadcast %98 : vector<5x1x1xf32> to vector<5x1x8xf32>
    %101 = arith.mulf %99, %100 : vector<5x1x8xf32>
    %102 = vector.extract_strided_slice %94 {offsets = [0, 0, 0], sizes = [5, 1, 8], strides = [1, 1, 1]} : vector<5x8x8xf32> to vector<5x1x8xf32>
    %103 = vector.broadcast %98 : vector<5x1x1xf32> to vector<5x1x8xf32>
    %104 = arith.mulf %102, %103 : vector<5x1x8xf32>
    %105 = vector.extract_strided_slice %91 {offsets = [0, 0, 0], sizes = [5, 8, 1], strides = [1, 1, 1]} : vector<5x8x8xf32> to vector<5x8x1xf32>
    %c0_i32 = arith.constant 0 : i32
    %106 = vector.broadcast %c0_i32 : i32 to vector<8x1xi32>
    %107 = arith.cmpi eq, %95, %106 : vector<8x1xi32>
    %108 = vector.broadcast %105 : vector<5x8x1xf32> to vector<5x8x8xf32>
    %109 = vector.broadcast %101 : vector<5x1x8xf32> to vector<5x8x8xf32>
    %110 = arith.mulf %108, %109 : vector<5x8x8xf32>
    %111 = arith.subf %91, %110 : vector<5x8x8xf32>
    %112 = vector.shape_cast %107 : vector<8x1xi1> to vector<1x8x1xi1>
    %113 = vector.broadcast %112 : vector<1x8x1xi1> to vector<5x8x8xi1>
    %114 = vector.shape_cast %101 : vector<5x1x8xf32> to vector<5x1x8xf32>
    %115 = vector.broadcast %114 : vector<5x1x8xf32> to vector<5x8x8xf32>
    %116 = arith.select %113, %115, %111 : vector<5x8x8xi1>, vector<5x8x8xf32>
    %117 = vector.broadcast %105 : vector<5x8x1xf32> to vector<5x8x8xf32>
    %118 = vector.broadcast %104 : vector<5x1x8xf32> to vector<5x8x8xf32>
    %119 = arith.mulf %117, %118 : vector<5x8x8xf32>
    %120 = arith.subf %94, %119 : vector<5x8x8xf32>
    %121 = vector.shape_cast %107 : vector<8x1xi1> to vector<1x8x1xi1>
    %122 = vector.broadcast %121 : vector<1x8x1xi1> to vector<5x8x8xi1>
    %123 = vector.shape_cast %104 : vector<5x1x8xf32> to vector<5x1x8xf32>
    %124 = vector.broadcast %123 : vector<5x1x8xf32> to vector<5x8x8xf32>
    %125 = arith.select %122, %124, %120 : vector<5x8x8xi1>, vector<5x8x8xf32>
    %126 = vector.extract_strided_slice %116 {offsets = [0, 1, 1], sizes = [5, 1, 1], strides = [1, 1, 1]} : vector<5x8x8xf32> to vector<5x1x1xf32>
    %cst_29 = arith.constant 1.000000e+00 : f32
    %127 = vector.broadcast %cst_29 : f32 to vector<5x1x1xf32>
    %128 = arith.divf %127, %126 : vector<5x1x1xf32>
    %129 = vector.extract_strided_slice %116 {offsets = [0, 1, 0], sizes = [5, 1, 8], strides = [1, 1, 1]} : vector<5x8x8xf32> to vector<5x1x8xf32>
    %130 = vector.broadcast %128 : vector<5x1x1xf32> to vector<5x1x8xf32>
    %131 = arith.mulf %129, %130 : vector<5x1x8xf32>
    %132 = vector.extract_strided_slice %125 {offsets = [0, 1, 0], sizes = [5, 1, 8], strides = [1, 1, 1]} : vector<5x8x8xf32> to vector<5x1x8xf32>
    %133 = vector.broadcast %128 : vector<5x1x1xf32> to vector<5x1x8xf32>
    %134 = arith.mulf %132, %133 : vector<5x1x8xf32>
    %135 = vector.extract_strided_slice %116 {offsets = [0, 0, 1], sizes = [5, 8, 1], strides = [1, 1, 1]} : vector<5x8x8xf32> to vector<5x8x1xf32>
    %c1_i32 = arith.constant 1 : i32
    %136 = vector.broadcast %c1_i32 : i32 to vector<8x1xi32>
    %137 = arith.cmpi eq, %95, %136 : vector<8x1xi32>
    %138 = vector.broadcast %135 : vector<5x8x1xf32> to vector<5x8x8xf32>
    %139 = vector.broadcast %131 : vector<5x1x8xf32> to vector<5x8x8xf32>
    %140 = arith.mulf %138, %139 : vector<5x8x8xf32>
    %141 = arith.subf %116, %140 : vector<5x8x8xf32>
    %142 = vector.shape_cast %137 : vector<8x1xi1> to vector<1x8x1xi1>
    %143 = vector.broadcast %142 : vector<1x8x1xi1> to vector<5x8x8xi1>
    %144 = vector.shape_cast %131 : vector<5x1x8xf32> to vector<5x1x8xf32>
    %145 = vector.broadcast %144 : vector<5x1x8xf32> to vector<5x8x8xf32>
    %146 = arith.select %143, %145, %141 : vector<5x8x8xi1>, vector<5x8x8xf32>
    %147 = vector.broadcast %135 : vector<5x8x1xf32> to vector<5x8x8xf32>
    %148 = vector.broadcast %134 : vector<5x1x8xf32> to vector<5x8x8xf32>
    %149 = arith.mulf %147, %148 : vector<5x8x8xf32>
    %150 = arith.subf %125, %149 : vector<5x8x8xf32>
    %151 = vector.shape_cast %137 : vector<8x1xi1> to vector<1x8x1xi1>
    %152 = vector.broadcast %151 : vector<1x8x1xi1> to vector<5x8x8xi1>
    %153 = vector.shape_cast %134 : vector<5x1x8xf32> to vector<5x1x8xf32>
    %154 = vector.broadcast %153 : vector<5x1x8xf32> to vector<5x8x8xf32>
    %155 = arith.select %152, %154, %150 : vector<5x8x8xi1>, vector<5x8x8xf32>
    %156 = vector.extract_strided_slice %146 {offsets = [0, 2, 2], sizes = [5, 1, 1], strides = [1, 1, 1]} : vector<5x8x8xf32> to vector<5x1x1xf32>
    %cst_30 = arith.constant 1.000000e+00 : f32
    %157 = vector.broadcast %cst_30 : f32 to vector<5x1x1xf32>
    %158 = arith.divf %157, %156 : vector<5x1x1xf32>
    %159 = vector.extract_strided_slice %146 {offsets = [0, 2, 0], sizes = [5, 1, 8], strides = [1, 1, 1]} : vector<5x8x8xf32> to vector<5x1x8xf32>
    %160 = vector.broadcast %158 : vector<5x1x1xf32> to vector<5x1x8xf32>
    %161 = arith.mulf %159, %160 : vector<5x1x8xf32>
    %162 = vector.extract_strided_slice %155 {offsets = [0, 2, 0], sizes = [5, 1, 8], strides = [1, 1, 1]} : vector<5x8x8xf32> to vector<5x1x8xf32>
    %163 = vector.broadcast %158 : vector<5x1x1xf32> to vector<5x1x8xf32>
    %164 = arith.mulf %162, %163 : vector<5x1x8xf32>
    %165 = vector.extract_strided_slice %146 {offsets = [0, 0, 2], sizes = [5, 8, 1], strides = [1, 1, 1]} : vector<5x8x8xf32> to vector<5x8x1xf32>
    %c2_i32 = arith.constant 2 : i32
    %166 = vector.broadcast %c2_i32 : i32 to vector<8x1xi32>
    %167 = arith.cmpi eq, %95, %166 : vector<8x1xi32>
    %168 = vector.broadcast %165 : vector<5x8x1xf32> to vector<5x8x8xf32>
    %169 = vector.broadcast %161 : vector<5x1x8xf32> to vector<5x8x8xf32>
    %170 = arith.mulf %168, %169 : vector<5x8x8xf32>
    %171 = arith.subf %146, %170 : vector<5x8x8xf32>
    %172 = vector.shape_cast %167 : vector<8x1xi1> to vector<1x8x1xi1>
    %173 = vector.broadcast %172 : vector<1x8x1xi1> to vector<5x8x8xi1>
    %174 = vector.shape_cast %161 : vector<5x1x8xf32> to vector<5x1x8xf32>
    %175 = vector.broadcast %174 : vector<5x1x8xf32> to vector<5x8x8xf32>
    %176 = arith.select %173, %175, %171 : vector<5x8x8xi1>, vector<5x8x8xf32>
    %177 = vector.broadcast %165 : vector<5x8x1xf32> to vector<5x8x8xf32>
    %178 = vector.broadcast %164 : vector<5x1x8xf32> to vector<5x8x8xf32>
    %179 = arith.mulf %177, %178 : vector<5x8x8xf32>
    %180 = arith.subf %155, %179 : vector<5x8x8xf32>
    %181 = vector.shape_cast %167 : vector<8x1xi1> to vector<1x8x1xi1>
    %182 = vector.broadcast %181 : vector<1x8x1xi1> to vector<5x8x8xi1>
    %183 = vector.shape_cast %164 : vector<5x1x8xf32> to vector<5x1x8xf32>
    %184 = vector.broadcast %183 : vector<5x1x8xf32> to vector<5x8x8xf32>
    %185 = arith.select %182, %184, %180 : vector<5x8x8xi1>, vector<5x8x8xf32>
    %186 = vector.extract_strided_slice %176 {offsets = [0, 3, 3], sizes = [5, 1, 1], strides = [1, 1, 1]} : vector<5x8x8xf32> to vector<5x1x1xf32>
    %cst_31 = arith.constant 1.000000e+00 : f32
    %187 = vector.broadcast %cst_31 : f32 to vector<5x1x1xf32>
    %188 = arith.divf %187, %186 : vector<5x1x1xf32>
    %189 = vector.extract_strided_slice %176 {offsets = [0, 3, 0], sizes = [5, 1, 8], strides = [1, 1, 1]} : vector<5x8x8xf32> to vector<5x1x8xf32>
    %190 = vector.broadcast %188 : vector<5x1x1xf32> to vector<5x1x8xf32>
    %191 = arith.mulf %189, %190 : vector<5x1x8xf32>
    %192 = vector.extract_strided_slice %185 {offsets = [0, 3, 0], sizes = [5, 1, 8], strides = [1, 1, 1]} : vector<5x8x8xf32> to vector<5x1x8xf32>
    %193 = vector.broadcast %188 : vector<5x1x1xf32> to vector<5x1x8xf32>
    %194 = arith.mulf %192, %193 : vector<5x1x8xf32>
    %195 = vector.extract_strided_slice %176 {offsets = [0, 0, 3], sizes = [5, 8, 1], strides = [1, 1, 1]} : vector<5x8x8xf32> to vector<5x8x1xf32>
    %c3_i32 = arith.constant 3 : i32
    %196 = vector.broadcast %c3_i32 : i32 to vector<8x1xi32>
    %197 = arith.cmpi eq, %95, %196 : vector<8x1xi32>
    %198 = vector.broadcast %195 : vector<5x8x1xf32> to vector<5x8x8xf32>
    %199 = vector.broadcast %191 : vector<5x1x8xf32> to vector<5x8x8xf32>
    %200 = arith.mulf %198, %199 : vector<5x8x8xf32>
    %201 = arith.subf %176, %200 : vector<5x8x8xf32>
    %202 = vector.shape_cast %197 : vector<8x1xi1> to vector<1x8x1xi1>
    %203 = vector.broadcast %202 : vector<1x8x1xi1> to vector<5x8x8xi1>
    %204 = vector.shape_cast %191 : vector<5x1x8xf32> to vector<5x1x8xf32>
    %205 = vector.broadcast %204 : vector<5x1x8xf32> to vector<5x8x8xf32>
    %206 = arith.select %203, %205, %201 : vector<5x8x8xi1>, vector<5x8x8xf32>
    %207 = vector.broadcast %195 : vector<5x8x1xf32> to vector<5x8x8xf32>
    %208 = vector.broadcast %194 : vector<5x1x8xf32> to vector<5x8x8xf32>
    %209 = arith.mulf %207, %208 : vector<5x8x8xf32>
    %210 = arith.subf %185, %209 : vector<5x8x8xf32>
    %211 = vector.shape_cast %197 : vector<8x1xi1> to vector<1x8x1xi1>
    %212 = vector.broadcast %211 : vector<1x8x1xi1> to vector<5x8x8xi1>
    %213 = vector.shape_cast %194 : vector<5x1x8xf32> to vector<5x1x8xf32>
    %214 = vector.broadcast %213 : vector<5x1x8xf32> to vector<5x8x8xf32>
    %215 = arith.select %212, %214, %210 : vector<5x8x8xi1>, vector<5x8x8xf32>
    %216 = vector.extract_strided_slice %206 {offsets = [0, 4, 4], sizes = [5, 1, 1], strides = [1, 1, 1]} : vector<5x8x8xf32> to vector<5x1x1xf32>
    %cst_32 = arith.constant 1.000000e+00 : f32
    %217 = vector.broadcast %cst_32 : f32 to vector<5x1x1xf32>
    %218 = arith.divf %217, %216 : vector<5x1x1xf32>
    %219 = vector.extract_strided_slice %206 {offsets = [0, 4, 0], sizes = [5, 1, 8], strides = [1, 1, 1]} : vector<5x8x8xf32> to vector<5x1x8xf32>
    %220 = vector.broadcast %218 : vector<5x1x1xf32> to vector<5x1x8xf32>
    %221 = arith.mulf %219, %220 : vector<5x1x8xf32>
    %222 = vector.extract_strided_slice %215 {offsets = [0, 4, 0], sizes = [5, 1, 8], strides = [1, 1, 1]} : vector<5x8x8xf32> to vector<5x1x8xf32>
    %223 = vector.broadcast %218 : vector<5x1x1xf32> to vector<5x1x8xf32>
    %224 = arith.mulf %222, %223 : vector<5x1x8xf32>
    %225 = vector.extract_strided_slice %206 {offsets = [0, 0, 4], sizes = [5, 8, 1], strides = [1, 1, 1]} : vector<5x8x8xf32> to vector<5x8x1xf32>
    %c4_i32 = arith.constant 4 : i32
    %226 = vector.broadcast %c4_i32 : i32 to vector<8x1xi32>
    %227 = arith.cmpi eq, %95, %226 : vector<8x1xi32>
    %228 = vector.broadcast %225 : vector<5x8x1xf32> to vector<5x8x8xf32>
    %229 = vector.broadcast %221 : vector<5x1x8xf32> to vector<5x8x8xf32>
    %230 = arith.mulf %228, %229 : vector<5x8x8xf32>
    %231 = arith.subf %206, %230 : vector<5x8x8xf32>
    %232 = vector.shape_cast %227 : vector<8x1xi1> to vector<1x8x1xi1>
    %233 = vector.broadcast %232 : vector<1x8x1xi1> to vector<5x8x8xi1>
    %234 = vector.shape_cast %221 : vector<5x1x8xf32> to vector<5x1x8xf32>
    %235 = vector.broadcast %234 : vector<5x1x8xf32> to vector<5x8x8xf32>
    %236 = arith.select %233, %235, %231 : vector<5x8x8xi1>, vector<5x8x8xf32>
    %237 = vector.broadcast %225 : vector<5x8x1xf32> to vector<5x8x8xf32>
    %238 = vector.broadcast %224 : vector<5x1x8xf32> to vector<5x8x8xf32>
    %239 = arith.mulf %237, %238 : vector<5x8x8xf32>
    %240 = arith.subf %215, %239 : vector<5x8x8xf32>
    %241 = vector.shape_cast %227 : vector<8x1xi1> to vector<1x8x1xi1>
    %242 = vector.broadcast %241 : vector<1x8x1xi1> to vector<5x8x8xi1>
    %243 = vector.shape_cast %224 : vector<5x1x8xf32> to vector<5x1x8xf32>
    %244 = vector.broadcast %243 : vector<5x1x8xf32> to vector<5x8x8xf32>
    %245 = arith.select %242, %244, %240 : vector<5x8x8xi1>, vector<5x8x8xf32>
    %246 = vector.extract_strided_slice %236 {offsets = [0, 5, 5], sizes = [5, 1, 1], strides = [1, 1, 1]} : vector<5x8x8xf32> to vector<5x1x1xf32>
    %cst_33 = arith.constant 1.000000e+00 : f32
    %247 = vector.broadcast %cst_33 : f32 to vector<5x1x1xf32>
    %248 = arith.divf %247, %246 : vector<5x1x1xf32>
    %249 = vector.extract_strided_slice %236 {offsets = [0, 5, 0], sizes = [5, 1, 8], strides = [1, 1, 1]} : vector<5x8x8xf32> to vector<5x1x8xf32>
    %250 = vector.broadcast %248 : vector<5x1x1xf32> to vector<5x1x8xf32>
    %251 = arith.mulf %249, %250 : vector<5x1x8xf32>
    %252 = vector.extract_strided_slice %245 {offsets = [0, 5, 0], sizes = [5, 1, 8], strides = [1, 1, 1]} : vector<5x8x8xf32> to vector<5x1x8xf32>
    %253 = vector.broadcast %248 : vector<5x1x1xf32> to vector<5x1x8xf32>
    %254 = arith.mulf %252, %253 : vector<5x1x8xf32>
    %255 = vector.extract_strided_slice %236 {offsets = [0, 0, 5], sizes = [5, 8, 1], strides = [1, 1, 1]} : vector<5x8x8xf32> to vector<5x8x1xf32>
    %c5_i32 = arith.constant 5 : i32
    %256 = vector.broadcast %c5_i32 : i32 to vector<8x1xi32>
    %257 = arith.cmpi eq, %95, %256 : vector<8x1xi32>
    %258 = vector.broadcast %255 : vector<5x8x1xf32> to vector<5x8x8xf32>
    %259 = vector.broadcast %251 : vector<5x1x8xf32> to vector<5x8x8xf32>
    %260 = arith.mulf %258, %259 : vector<5x8x8xf32>
    %261 = arith.subf %236, %260 : vector<5x8x8xf32>
    %262 = vector.shape_cast %257 : vector<8x1xi1> to vector<1x8x1xi1>
    %263 = vector.broadcast %262 : vector<1x8x1xi1> to vector<5x8x8xi1>
    %264 = vector.shape_cast %251 : vector<5x1x8xf32> to vector<5x1x8xf32>
    %265 = vector.broadcast %264 : vector<5x1x8xf32> to vector<5x8x8xf32>
    %266 = arith.select %263, %265, %261 : vector<5x8x8xi1>, vector<5x8x8xf32>
    %267 = vector.broadcast %255 : vector<5x8x1xf32> to vector<5x8x8xf32>
    %268 = vector.broadcast %254 : vector<5x1x8xf32> to vector<5x8x8xf32>
    %269 = arith.mulf %267, %268 : vector<5x8x8xf32>
    %270 = arith.subf %245, %269 : vector<5x8x8xf32>
    %271 = vector.shape_cast %257 : vector<8x1xi1> to vector<1x8x1xi1>
    %272 = vector.broadcast %271 : vector<1x8x1xi1> to vector<5x8x8xi1>
    %273 = vector.shape_cast %254 : vector<5x1x8xf32> to vector<5x1x8xf32>
    %274 = vector.broadcast %273 : vector<5x1x8xf32> to vector<5x8x8xf32>
    %275 = arith.select %272, %274, %270 : vector<5x8x8xi1>, vector<5x8x8xf32>
    %276 = vector.extract_strided_slice %266 {offsets = [0, 6, 6], sizes = [5, 1, 1], strides = [1, 1, 1]} : vector<5x8x8xf32> to vector<5x1x1xf32>
    %cst_34 = arith.constant 1.000000e+00 : f32
    %277 = vector.broadcast %cst_34 : f32 to vector<5x1x1xf32>
    %278 = arith.divf %277, %276 : vector<5x1x1xf32>
    %279 = vector.extract_strided_slice %266 {offsets = [0, 6, 0], sizes = [5, 1, 8], strides = [1, 1, 1]} : vector<5x8x8xf32> to vector<5x1x8xf32>
    %280 = vector.broadcast %278 : vector<5x1x1xf32> to vector<5x1x8xf32>
    %281 = arith.mulf %279, %280 : vector<5x1x8xf32>
    %282 = vector.extract_strided_slice %275 {offsets = [0, 6, 0], sizes = [5, 1, 8], strides = [1, 1, 1]} : vector<5x8x8xf32> to vector<5x1x8xf32>
    %283 = vector.broadcast %278 : vector<5x1x1xf32> to vector<5x1x8xf32>
    %284 = arith.mulf %282, %283 : vector<5x1x8xf32>
    %285 = vector.extract_strided_slice %266 {offsets = [0, 0, 6], sizes = [5, 8, 1], strides = [1, 1, 1]} : vector<5x8x8xf32> to vector<5x8x1xf32>
    %c6_i32 = arith.constant 6 : i32
    %286 = vector.broadcast %c6_i32 : i32 to vector<8x1xi32>
    %287 = arith.cmpi eq, %95, %286 : vector<8x1xi32>
    %288 = vector.broadcast %285 : vector<5x8x1xf32> to vector<5x8x8xf32>
    %289 = vector.broadcast %281 : vector<5x1x8xf32> to vector<5x8x8xf32>
    %290 = arith.mulf %288, %289 : vector<5x8x8xf32>
    %291 = arith.subf %266, %290 : vector<5x8x8xf32>
    %292 = vector.shape_cast %287 : vector<8x1xi1> to vector<1x8x1xi1>
    %293 = vector.broadcast %292 : vector<1x8x1xi1> to vector<5x8x8xi1>
    %294 = vector.shape_cast %281 : vector<5x1x8xf32> to vector<5x1x8xf32>
    %295 = vector.broadcast %294 : vector<5x1x8xf32> to vector<5x8x8xf32>
    %296 = arith.select %293, %295, %291 : vector<5x8x8xi1>, vector<5x8x8xf32>
    %297 = vector.broadcast %285 : vector<5x8x1xf32> to vector<5x8x8xf32>
    %298 = vector.broadcast %284 : vector<5x1x8xf32> to vector<5x8x8xf32>
    %299 = arith.mulf %297, %298 : vector<5x8x8xf32>
    %300 = arith.subf %275, %299 : vector<5x8x8xf32>
    %301 = vector.shape_cast %287 : vector<8x1xi1> to vector<1x8x1xi1>
    %302 = vector.broadcast %301 : vector<1x8x1xi1> to vector<5x8x8xi1>
    %303 = vector.shape_cast %284 : vector<5x1x8xf32> to vector<5x1x8xf32>
    %304 = vector.broadcast %303 : vector<5x1x8xf32> to vector<5x8x8xf32>
    %305 = arith.select %302, %304, %300 : vector<5x8x8xi1>, vector<5x8x8xf32>
    %306 = vector.extract_strided_slice %296 {offsets = [0, 7, 7], sizes = [5, 1, 1], strides = [1, 1, 1]} : vector<5x8x8xf32> to vector<5x1x1xf32>
    %cst_35 = arith.constant 1.000000e+00 : f32
    %307 = vector.broadcast %cst_35 : f32 to vector<5x1x1xf32>
    %308 = arith.divf %307, %306 : vector<5x1x1xf32>
    %309 = vector.extract_strided_slice %305 {offsets = [0, 7, 0], sizes = [5, 1, 8], strides = [1, 1, 1]} : vector<5x8x8xf32> to vector<5x1x8xf32>
    %310 = vector.broadcast %308 : vector<5x1x1xf32> to vector<5x1x8xf32>
    %311 = arith.mulf %309, %310 : vector<5x1x8xf32>
    %312 = vector.extract_strided_slice %296 {offsets = [0, 0, 7], sizes = [5, 8, 1], strides = [1, 1, 1]} : vector<5x8x8xf32> to vector<5x8x1xf32>
    %c7_i32 = arith.constant 7 : i32
    %313 = vector.broadcast %c7_i32 : i32 to vector<8x1xi32>
    %314 = arith.cmpi eq, %95, %313 : vector<8x1xi32>
    %315 = vector.broadcast %312 : vector<5x8x1xf32> to vector<5x8x8xf32>
    %316 = vector.broadcast %311 : vector<5x1x8xf32> to vector<5x8x8xf32>
    %317 = arith.mulf %315, %316 : vector<5x8x8xf32>
    %318 = arith.subf %305, %317 : vector<5x8x8xf32>
    %319 = vector.shape_cast %314 : vector<8x1xi1> to vector<1x8x1xi1>
    %320 = vector.broadcast %319 : vector<1x8x1xi1> to vector<5x8x8xi1>
    %321 = vector.shape_cast %311 : vector<5x1x8xf32> to vector<5x1x8xf32>
    %322 = vector.broadcast %321 : vector<5x1x8xf32> to vector<5x8x8xf32>
    %323 = arith.select %320, %322, %318 : vector<5x8x8xi1>, vector<5x8x8xf32>
    %324 = vector.extract_strided_slice %323 {offsets = [0, 0, 0], sizes = [1, 8, 8], strides = [1, 1, 1]} : vector<5x8x8xf32> to vector<1x8x8xf32>
    %325 = vector.shape_cast %324 : vector<1x8x8xf32> to vector<8x8xf32>
    %326 = vector.extract_strided_slice %323 {offsets = [1, 0, 0], sizes = [4, 8, 8], strides = [1, 1, 1]} : vector<5x8x8xf32> to vector<4x8x8xf32>
    %327 = arith.mulf %57, %325 : vector<8x8xf32>
    %cst_36 = arith.constant dense<0.000000e+00> : vector<8xf32>
    %328 = vector.multi_reduction <add>, %327, %cst_36 [0] : vector<8x8xf32> to vector<8xf32>
    %329 = vector.shape_cast %328 : vector<8xf32> to vector<1x8xf32>
    %330 = vector.shape_cast %57 : vector<8x8xf32> to vector<1x8x8xf32>
    %331 = vector.broadcast %330 : vector<1x8x8xf32> to vector<4x8x8xf32>
    %332 = arith.mulf %331, %326 : vector<4x8x8xf32>
    %cst_37 = arith.constant dense<0.000000e+00> : vector<4x8xf32>
    %333 = vector.multi_reduction <add>, %332, %cst_37 [1] : vector<4x8x8xf32> to vector<4x8xf32>
    %334 = vector.shape_cast %75 : vector<4x8xf32> to vector<4x1x8xf32>
    %335 = vector.broadcast %334 : vector<4x1x8xf32> to vector<4x8x8xf32>
    %336 = arith.mulf %326, %335 : vector<4x8x8xf32>
    %cst_38 = arith.constant dense<0.000000e+00> : vector<4x8xf32>
    %337 = vector.multi_reduction <add>, %336, %cst_38 [2] : vector<4x8x8xf32> to vector<4x8xf32>
    %338 = vector.shape_cast %337 : vector<4x8xf32> to vector<4x8x1xf32>
    %339 = vector.shape_cast %57 : vector<8x8xf32> to vector<1x8x8xf32>
    %340 = vector.broadcast %338 : vector<4x8x1xf32> to vector<4x8x8xf32>
    %341 = vector.broadcast %339 : vector<1x8x8xf32> to vector<4x8x8xf32>
    %342 = arith.mulf %340, %341 : vector<4x8x8xf32>
    %cst_39 = arith.constant dense<0.000000e+00> : vector<4x8xf32>
    %343 = vector.multi_reduction <add>, %342, %cst_39 [1] : vector<4x8x8xf32> to vector<4x8xf32>
    %344 = vector.broadcast %2 : f32 to vector<4x8xf32>
    %345 = arith.mulf %344, %343 : vector<4x8xf32>
    %346 = vector.broadcast %1 : f32 to vector<1x8xf32>
    %347 = arith.subf %346, %329 : vector<1x8xf32>
    %348 = vector.broadcast %347 : vector<1x8xf32> to vector<4x8xf32>
    %349 = arith.addf %348, %333 : vector<4x8xf32>
    %350 = tpu.transpose %345, [1, 0] : vector<4x8xf32> -> vector<8x4xf32>
    %351 = tpu.transpose %349, [1, 0] : vector<4x8xf32> -> vector<8x4xf32>
    %c0_40 = arith.constant 0 : index
    %c0_41 = arith.constant 0 : index
    %352 = vector.load %arg15[%c0_40, %c0_41] : memref<8x4xf32, #tpu.memory_space<vmem>>, vector<8x4xf32>
    tpu.vector_store %arg15[%c0_40, %c0_41], %350 {strides = array<i32>} : memref<8x4xf32, #tpu.memory_space<vmem>>, vector<8x4xf32>,
    %c0_42 = arith.constant 0 : index
    %c0_43 = arith.constant 0 : index
    %353 = vector.load %arg16[%c0_42, %c0_43] : memref<8x4xf32, #tpu.memory_space<vmem>>, vector<8x4xf32>
    tpu.vector_store %arg16[%c0_42, %c0_43], %351 {strides = array<i32>} : memref<8x4xf32, #tpu.memory_space<vmem>>, vector<8x4xf32>,
    %cst_44 = arith.constant 9.99999974E-5 : f32
    %cst_45 = arith.constant 1.000000e+03 : f32
    %354 = vector.broadcast %cst_44 : f32 to vector<8x4xf32>
    %355 = arith.maximumf %354, %351 : vector<8x4xf32>
    %356 = vector.broadcast %cst_45 : f32 to vector<8x4xf32>
    %357 = arith.minimumf %356, %355 : vector<8x4xf32>
    %358 = math.sqrt %357 : vector<8x4xf32>
    %c0_46 = arith.constant 0 : index
    %c0_47 = arith.constant 0 : index
    %359 = vector.load %arg10[%c0_46, %c0_47] : memref<4x32xf32, #tpu.memory_space<vmem>>, vector<4x32xf32>
    %c0_48 = arith.constant 0 : index
    %c0_49 = arith.constant 0 : index
    %360 = vector.load %arg11[%c0_48, %c0_49] : memref<1x32xf32, #tpu.memory_space<vmem>>, vector<1x32xf32>
    %c0_50 = arith.constant 0 : index
    %c0_51 = arith.constant 0 : index
    %361 = vector.load %arg12[%c0_50, %c0_51] : memref<32x256xf32, #tpu.memory_space<vmem>>, vector<32x256xf32>
    %c0_52 = arith.constant 0 : index
    %c0_53 = arith.constant 0 : index
    %362 = vector.load %arg13[%c0_52, %c0_53] : memref<1x256xf32, #tpu.memory_space<vmem>>, vector<1x256xf32>
    %c0_54 = arith.constant 0 : index
    %c0_55 = arith.constant 0 : index
    %c0_56 = arith.constant 0 : index
    %363 = vector.load %arg14[%c0_54, %c0_55, %c0_56] : memref<1x8x4xf32, #tpu.memory_space<vmem>>, vector<1x8x4xf32>
    %364 = vector.shape_cast %363 : vector<1x8x4xf32> to vector<8x4xf32>
    %365 = arith.mulf %358, %364 : vector<8x4xf32>
    %366 = arith.addf %350, %365 : vector<8x4xf32>
    %cst_57 = arith.constant dense<0.000000e+00> : vector<8x32xf32>
    %367 = tpu.matmul %366, %359, %cst_57 {dimension_numbers = #tpu.dot_dimension_numbers<[1], [0], [0], [1], [0, 0, 1, 1], [], []>} : vector<8x4xf32>, vector<4x32xf32>, vector<8x32xf32> -> vector<8x32xf32>
    %368 = vector.broadcast %360 : vector<1x32xf32> to vector<8x32xf32>
    %369 = arith.addf %367, %368 : vector<8x32xf32>
    %370 = math.tanh %369 : vector<8x32xf32>
    %cst_58 = arith.constant dense<0.000000e+00> : vector<8x256xf32>
    %371 = tpu.matmul %370, %361, %cst_58 {dimension_numbers = #tpu.dot_dimension_numbers<[1], [0], [0], [1], [0, 0, 1, 1], [], []>} : vector<8x32xf32>, vector<32x256xf32>, vector<8x256xf32> -> vector<8x256xf32>
    %372 = vector.broadcast %362 : vector<1x256xf32> to vector<8x256xf32>
    %373 = arith.addf %371, %372 : vector<8x256xf32>
    %cst_59 = arith.constant 0.000000e+00 : f32
    %374 = vector.broadcast %cst_59 : f32 to vector<8x256xf32>
    %375 = arith.subf %374, %373 : vector<8x256xf32>
    %376 = math.exp %375 : vector<8x256xf32>
    %cst_60 = arith.constant 1.000000e+00 : f32
    %377 = vector.broadcast %cst_60 : f32 to vector<8x256xf32>
    %378 = arith.addf %377, %376 : vector<8x256xf32>
    %379 = tpu.reciprocal %378 : vector<8x256xf32> -> vector<8x256xf32>
    %c0_61 = arith.constant 0 : index
    %c0_62 = arith.constant 0 : index
    %c0_63 = arith.constant 0 : index
    %380 = vector.load %arg17[%c0_61, %c0_62, %c0_63] : memref<1x8x256xf32, #tpu.memory_space<vmem>>, vector<1x8x256xf32>
    %381 = vector.shape_cast %380 : vector<1x8x256xf32> to vector<8x256xf32>
    %382 = vector.shape_cast %379 : vector<8x256xf32> to vector<1x8x256xf32>
    tpu.vector_store %arg17[%c0_61, %c0_62, %c0_63], %382 {strides = array<i32>} : memref<1x8x256xf32, #tpu.memory_space<vmem>>, vector<1x8x256xf32>,
    return
  }
}

</mosaic_0001>

<llo_original>
// kernel: tpu_custom_call.1
$region0: #{tpu_custom_call.1}
  #allocation0 [shape = 'u32[]', space=smem, size = 0x4, offset = 0x4, fixed_abs, tag = 'smem constant byte address 0x4 - core index']
  #allocation1 [shape = 'u32[144,128]{1,0:T(1,128)}', space=vmem, size = 0x12000, scoped, tag = 'internal scratch']
  %s0 = inlined_call_operand.vmem [shape: f32[4], index: 0, kind: input, shape index: {}]
  %s1 = inlined_call_operand.vmem [shape: f32[8,256], index: 1, kind: input, shape index: {}]
  %s2 = inlined_call_operand.vmem [shape: f32[8,1], index: 2, kind: input, shape index: {}]
  %s3 = inlined_call_operand.vmem [shape: f32[1,8], index: 3, kind: input, shape index: {}]
  %s4 = inlined_call_operand.vmem [shape: f32[8,1], index: 4, kind: input, shape index: {}]
  %s5 = inlined_call_operand.vmem [shape: f32[1,8], index: 5, kind: input, shape index: {}]
  %s6 = inlined_call_operand.vmem [shape: f32[256,32], index: 6, kind: input, shape index: {}]
  %s7 = inlined_call_operand.vmem [shape: f32[1,32], index: 7, kind: input, shape index: {}]
  %s8 = inlined_call_operand.vmem [shape: f32[32,8], index: 8, kind: input, shape index: {}]
  %s9 = inlined_call_operand.vmem [shape: f32[1,8], index: 9, kind: input, shape index: {}]
  %s10 = inlined_call_operand.vmem [shape: f32[4,32], index: 10, kind: input, shape index: {}]
  %s11 = inlined_call_operand.vmem [shape: f32[1,32], index: 11, kind: input, shape index: {}]
  %s12 = inlined_call_operand.vmem [shape: f32[32,256], index: 12, kind: input, shape index: {}]
  %s13 = inlined_call_operand.vmem [shape: f32[1,256], index: 13, kind: input, shape index: {}]
  %s14 = inlined_call_operand.vmem [shape: f32[1,8,4], index: 14, kind: input, shape index: {}]
  %s15 = inlined_call_operand.vmem [shape: f32[8,4], index: 15, kind: output, shape index: {0}]
  %s16 = inlined_call_operand.vmem [shape: f32[8,4], index: 16, kind: output, shape index: {1}]
  %s17 = inlined_call_operand.hbm [shape: f32[1,8,256], index: 17, kind: output, shape index: {2}]
  %18 = xla_tuple %s15, %s16, %s17
  %s19 = sld [smem:[#allocation0]]
  $region90: #{tpu_custom_call.1} parent=0
    _
  %s21 = ssub.s32 1, %s19
  %s22 = scalar_select 0, %s21, %s19
  $region1: #{tpu_custom_call.1} parent=0
    #allocation2 [shape = 'u8[512]{0}', space=smem, size = 0x200, scoped, tag = 'input window, operand 0, single buffered']
    #allocation3 [shape = 's32[1]{0}', space=sflag, size = 0x4, scoped, tag = 'scoped memory for tpu_custom_call.1']
    #allocation4 [shape = 's32[1]{0}', space=sflag, size = 0x4, scoped, tag = 'scoped memory for tpu_custom_call.1']
    #allocation5 [shape = 'u8[8192]{0}', space=vmem, size = 0x2000, scoped, tag = 'output window, operand 2, single buffered']
    %23 = vsyncpa [#allocation4], 0
    %24 = vsyncpa [#allocation3], 0
    // Predicated region
    $region2: #{tpu_custom_call.1} parent=1 // pred_check
      _
    $region3: #{tpu_custom_call.1} parent=1 // pred_check_branch
      %26 = sbr.rel (0) target = $region5
    $region4: #{tpu_custom_call.1} parent=1 // pred_region
      %s28 = ssub.s32 16, 16
      %29 = vsyncadd [#allocation4], %s28
      %s31 = sshll.u32 %s0, 4
      %s32 = int_to_ptr.vmem [resolvable:$true] %s31
      %34 = dma.vmem_to_smem %s32, 16, [#allocation2], [#allocation4]
    $region5: #{tpu_custom_call.1} parent=1 // pred_fallthru
      _
    // Predicated region
    $region6: #{tpu_custom_call.1} parent=1 // pred_check
      _
    $region7: #{tpu_custom_call.1} parent=1 // pred_check_branch
      %36 = sbr.rel (0) target = $region9
    $region8: #{tpu_custom_call.1} parent=1 // pred_region
      _
    $region9: #{tpu_custom_call.1} parent=1 // pred_fallthru
      _
    // Predicated region
    $region10: #{tpu_custom_call.1} parent=1 // pred_check
      _
    $region11: #{tpu_custom_call.1} parent=1 // pred_check_branch
      %38 = sbr.rel (0) target = $region13
    $region12: #{tpu_custom_call.1} parent=1 // pred_region
      _
    $region13: #{tpu_custom_call.1} parent=1 // pred_fallthru
      _
    // Predicated region
    $region14: #{tpu_custom_call.1} parent=1 // pred_check
      _
    $region15: #{tpu_custom_call.1} parent=1 // pred_check_branch
      %40 = sbr.rel (0) target = $region17
    $region16: #{tpu_custom_call.1} parent=1 // pred_region
      _
    $region17: #{tpu_custom_call.1} parent=1 // pred_fallthru
      _
    // Predicated region
    $region18: #{tpu_custom_call.1} parent=1 // pred_check
      _
    $region19: #{tpu_custom_call.1} parent=1 // pred_check_branch
      %42 = sbr.rel (0) target = $region21
    $region20: #{tpu_custom_call.1} parent=1 // pred_region
      _
    $region21: #{tpu_custom_call.1} parent=1 // pred_fallthru
      _
    // Predicated region
    $region22: #{tpu_custom_call.1} parent=1 // pred_check
      _
    $region23: #{tpu_custom_call.1} parent=1 // pred_check_branch
      %44 = sbr.rel (0) target = $region25
    $region24: #{tpu_custom_call.1} parent=1 // pred_region
      _
    $region25: #{tpu_custom_call.1} parent=1 // pred_fallthru
      _
    // Predicated region
    $region26: #{tpu_custom_call.1} parent=1 // pred_check
      _
    $region27: #{tpu_custom_call.1} parent=1 // pred_check_branch
      %46 = sbr.rel (0) target = $region29
    $region28: #{tpu_custom_call.1} parent=1 // pred_region
      _
    $region29: #{tpu_custom_call.1} parent=1 // pred_fallthru
      _
    // Predicated region
    $region30: #{tpu_custom_call.1} parent=1 // pred_check
      _
    $region31: #{tpu_custom_call.1} parent=1 // pred_check_branch
      %48 = sbr.rel (0) target = $region33
    $region32: #{tpu_custom_call.1} parent=1 // pred_region
      _
    $region33: #{tpu_custom_call.1} parent=1 // pred_fallthru
      _
    // Predicated region
    $region34: #{tpu_custom_call.1} parent=1 // pred_check
      _
    $region35: #{tpu_custom_call.1} parent=1 // pred_check_branch
      %50 = sbr.rel (0) target = $region37
    $region36: #{tpu_custom_call.1} parent=1 // pred_region
      _
    $region37: #{tpu_custom_call.1} parent=1 // pred_fallthru
      _
    // Predicated region
    $region38: #{tpu_custom_call.1} parent=1 // pred_check
      _
    $region39: #{tpu_custom_call.1} parent=1 // pred_check_branch
      %52 = sbr.rel (0) target = $region41
    $region40: #{tpu_custom_call.1} parent=1 // pred_region
      _
    $region41: #{tpu_custom_call.1} parent=1 // pred_fallthru
      _
    // Predicated region
    $region42: #{tpu_custom_call.1} parent=1 // pred_check
      _
    $region43: #{tpu_custom_call.1} parent=1 // pred_check_branch
      %54 = sbr.rel (0) target = $region45
    $region44: #{tpu_custom_call.1} parent=1 // pred_region
      _
    $region45: #{tpu_custom_call.1} parent=1 // pred_fallthru
      _
    // Predicated region
    $region46: #{tpu_custom_call.1} parent=1 // pred_check
      _
    $region47: #{tpu_custom_call.1} parent=1 // pred_check_branch
      %56 = sbr.rel (0) target = $region49
    $region48: #{tpu_custom_call.1} parent=1 // pred_region
      _
    $region49: #{tpu_custom_call.1} parent=1 // pred_fallthru
      _
    // Predicated region
    $region50: #{tpu_custom_call.1} parent=1 // pred_check
      _
    $region51: #{tpu_custom_call.1} parent=1 // pred_check_branch
      %58 = sbr.rel (0) target = $region53
    $region52: #{tpu_custom_call.1} parent=1 // pred_region
      _
    $region53: #{tpu_custom_call.1} parent=1 // pred_fallthru
      _
    // Predicated region
    $region54: #{tpu_custom_call.1} parent=1 // pred_check
      _
    $region55: #{tpu_custom_call.1} parent=1 // pred_check_branch
      %60 = sbr.rel (0) target = $region57
    $region56: #{tpu_custom_call.1} parent=1 // pred_region
      _
    $region57: #{tpu_custom_call.1} parent=1 // pred_fallthru
      _
    // Predicated region
    $region58: #{tpu_custom_call.1} parent=1 // pred_check
      _
    $region59: #{tpu_custom_call.1} parent=1 // pred_check_branch
      %62 = sbr.rel (0) target = $region61
    $region60: #{tpu_custom_call.1} parent=1 // pred_region
      _
    $region61: #{tpu_custom_call.1} parent=1 // pred_fallthru
      _
    // Predicated region
    $region62: #{tpu_custom_call.1} parent=1 // pred_check
      _
    $region63: #{tpu_custom_call.1} parent=1 // pred_check_branch
      %64 = sbr.rel (0) target = $region65
    $region64: #{tpu_custom_call.1} parent=1 // pred_region
      %65 = dma.done [#allocation4], 16
    $region65: #{tpu_custom_call.1} parent=1 // pred_fallthru
      _
    %66 = sfence
    %s67 = sld [smem:[#allocation2]]
    %s68 = sld [smem:[#allocation2 + $0x1]]
    %s69 = sld [smem:[#allocation2 + $0x2]]
    %s70 = sld [smem:[#allocation2 + $0x3]]
    %s71 = smul.f32 %s67, %s67
    %v72 = vstv %s71
    %v73 = vrcp.pop %v72
    %s74 = vtos %v73
    %v75 = vld [vmem:[%s1] sm:$0xff]
    %v76 = vld [vmem:[%s1 + $0x8] sm:$0xff]
    %v77 = vld [vmem:[%s6] sm:$0xff]
    %v78 = vld [vmem:[%s6 + $0x8] sm:$0xff]
    %v79 = vld [vmem:[%s6 + $0x10] sm:$0xff]
    %v80 = vld [vmem:[%s6 + $0x18] sm:$0xff]
    %v81 = vld [vmem:[%s6 + $0x20] sm:$0xff]
    %v82 = vld [vmem:[%s6 + $0x28] sm:$0xff]
    %v83 = vld [vmem:[%s6 + $0x30] sm:$0xff]
    %v84 = vld [vmem:[%s6 + $0x38] sm:$0xff]
    %v85 = vld [vmem:[%s6 + $0x40] sm:$0xff]
    %v86 = vld [vmem:[%s6 + $0x48] sm:$0xff]
    %v87 = vld [vmem:[%s6 + $0x50] sm:$0xff]
    %v88 = vld [vmem:[%s6 + $0x58] sm:$0xff]
    %v89 = vld [vmem:[%s6 + $0x60] sm:$0xff]
    %v90 = vld [vmem:[%s6 + $0x68] sm:$0xff]
    %v91 = vld [vmem:[%s6 + $0x70] sm:$0xff]
    %v92 = vld [vmem:[%s6 + $0x78] sm:$0xff]
    %v93 = vld [vmem:[%s6 + $0x80] sm:$0xff]
    %v94 = vld [vmem:[%s6 + $0x88] sm:$0xff]
    %v95 = vld [vmem:[%s6 + $0x90] sm:$0xff]
    %v96 = vld [vmem:[%s6 + $0x98] sm:$0xff]
    %v97 = vld [vmem:[%s6 + $0xa0] sm:$0xff]
    %v98 = vld [vmem:[%s6 + $0xa8] sm:$0xff]
    %v99 = vld [vmem:[%s6 + $0xb0] sm:$0xff]
    %v100 = vld [vmem:[%s6 + $0xb8] sm:$0xff]
    %v101 = vld [vmem:[%s6 + $0xc0] sm:$0xff]
    %v102 = vld [vmem:[%s6 + $0xc8] sm:$0xff]
    %v103 = vld [vmem:[%s6 + $0xd0] sm:$0xff]
    %v104 = vld [vmem:[%s6 + $0xd8] sm:$0xff]
    %v105 = vld [vmem:[%s6 + $0xe0] sm:$0xff]
    %v106 = vld [vmem:[%s6 + $0xe8] sm:$0xff]
    %v107 = vld [vmem:[%s6 + $0xf0] sm:$0xff]
    %v108 = vld [vmem:[%s6 + $0xf8] sm:$0xff]
    %v109 = vld [vmem:[%s7] sm:$0x1]
    %v111 = vlaneseq
    %v112 = vshrl.u32 %v111, 7
    %v113 = vsub.s32 0, %v112
    %v114 = vrot.slane %v109, %v113
    %116 = vmatprep.subr.mxu0 0.0
    %117 = vmatpush1.msra.mxu0 %v77
    %118 = vmatprep.subr.mxu0 0.0
    %119 = vmatpush1.msra.mxu0 %v78
    %120 = vmatprep.subr.mxu0 0.0
    %121 = vmatpush1.msra.mxu0 %v79
    %122 = vmatprep.subr.mxu0 0.0
    %123 = vmatpush1.msra.mxu0 %v80
    %124 = vmatprep.subr.mxu0 0.0
    %125 = vmatpush1.msra.mxu0 %v81
    %126 = vmatprep.subr.mxu0 0.0
    %127 = vmatpush1.msra.mxu0 %v82
    %128 = vmatprep.subr.mxu0 0.0
    %129 = vmatpush1.msra.mxu0 %v83
    %130 = vmatprep.subr.mxu0 0.0
    %131 = vmatpush1.msra.mxu0 %v84
    %132 = vmatprep.subr.mxu0 0.0
    %133 = vmatpush1.msra.mxu0 %v85
    %134 = vmatprep.subr.mxu0 0.0
    %135 = vmatpush1.msra.mxu0 %v86
    %136 = vmatprep.subr.mxu0 0.0
    %137 = vmatpush1.msra.mxu0 %v87
    %138 = vmatprep.subr.mxu0 0.0
    %139 = vmatpush1.msra.mxu0 %v88
    %140 = vmatprep.subr.mxu0 0.0
    %141 = vmatpush1.msra.mxu0 %v89
    %142 = vmatprep.subr.mxu0 0.0
    %143 = vmatpush1.msra.mxu0 %v90
    %144 = vmatprep.subr.mxu0 0.0
    %145 = vmatpush1.msra.mxu0 %v91
    %146 = vmatprep.subr.mxu0 0.0
    %147 = vmatpush1.msra.mxu0 %v92
    %148 = vmatprep.subr.mxu0 0.0
    %149 = vmatpush1.msra.mxu0 %v93
    %150 = vmatprep.subr.mxu0 0.0
    %151 = vmatpush1.msra.mxu0 %v94
    %152 = vmatprep.subr.mxu0 0.0
    %153 = vmatpush1.msra.mxu0 %v95
    %154 = vmatprep.subr.mxu0 0.0
    %155 = vmatpush1.msra.mxu0 %v96
    %156 = vmatprep.subr.mxu0 0.0
    %157 = vmatpush1.msra.mxu0 %v97
    %158 = vmatprep.subr.mxu0 0.0
    %159 = vmatpush1.msra.mxu0 %v98
    %160 = vmatprep.subr.mxu0 0.0
    %161 = vmatpush1.msra.mxu0 %v99
    %162 = vmatprep.subr.mxu0 0.0
    %163 = vmatpush1.msra.mxu0 %v100
    %164 = vmatprep.subr.mxu0 0.0
    %165 = vmatpush1.msra.mxu0 %v101
    %166 = vmatprep.subr.mxu0 0.0
    %167 = vmatpush1.msra.mxu0 %v102
    %168 = vmatprep.subr.mxu0 0.0
    %169 = vmatpush1.msra.mxu0 %v103
    %170 = vmatprep.subr.mxu0 0.0
    %171 = vmatpush1.msra.mxu0 %v104
    %172 = vmatprep.subr.mxu0 0.0
    %173 = vmatpush1.msra.mxu0 %v105
    %174 = vmatprep.subr.mxu0 0.0
    %175 = vmatpush1.msra.mxu0 %v106
    %176 = vmatprep.subr.mxu0 0.0
    %177 = vmatpush1.msra.mxu0 %v107
    %178 = vmatprep.subr.mxu0 0.0
    %179 = vmatpush1.msra.mxu0 %v108
    %180 = vmatprep.mubr.f32.mxu0 %v76
    %181 = vmatmul.mubr.f32.gmra.mrb[0].mxu0 %v75
    %v182 = vpop.f32.mrb[0].mxu0
    %v183 = vadd.f32 %v114, %v182
    %v184 = vpop.f32.mrb[0].mxu0
    %185 = vdwg.mxu0
    %v186 = vtanh.pop %v183
    %v187 = vld [vmem:[%s8] sm:$0xff]
    %v188 = vld [vmem:[%s8 + $0x8] sm:$0xff]
    %v189 = vld [vmem:[%s8 + $0x10] sm:$0xff]
    %v190 = vld [vmem:[%s8 + $0x18] sm:$0xff]
    %v191 = vld [vmem:[%s9] sm:$0x1]
    %v193 = vlaneseq
    %v194 = vshrl.u32 %v193, 7
    %v195 = vsub.s32 0, %v194
    %v196 = vrot.slane %v191, %v195
    %vm198 = vcmask 261120
    %v200 = vsel %vm198, %v186, 0
    %202 = vmatprep.subr.mxu0 0.0
    %203 = vmatpush1.msra.mxu0 %v187
    %204 = vmatprep.subr.mxu0 0.0
    %205 = vmatpush1.msra.mxu0 %v188
    %206 = vmatprep.subr.mxu0 0.0
    %207 = vmatpush1.msra.mxu0 %v189
    %208 = vmatprep.subr.mxu0 0.0
    %209 = vmatpush1.msra.mxu0 %v190
    %210 = vmatprep.subr.mxu0 0.0
    %211 = vmatpush1.msra.mxu0 0.0
    %212 = vmatprep.subr.mxu0 0.0
    %213 = vmatpush1.msra.mxu0 0.0
    %214 = vmatprep.subr.mxu0 0.0
    %215 = vmatpush1.msra.mxu0 0.0
    %216 = vmatprep.subr.mxu0 0.0
    %217 = vmatpush1.msra.mxu0 0.0
    %218 = vmatprep.subr.mxu0 0.0
    %219 = vmatpush1.msra.mxu0 0.0
    %220 = vmatprep.subr.mxu0 0.0
    %221 = vmatpush1.msra.mxu0 0.0
    %222 = vmatprep.subr.mxu0 0.0
    %223 = vmatpush1.msra.mxu0 0.0
    %224 = vmatprep.subr.mxu0 0.0
    %225 = vmatpush1.msra.mxu0 0.0
    %226 = vmatprep.subr.mxu0 0.0
    %227 = vmatpush1.msra.mxu0 0.0
    %228 = vmatprep.subr.mxu0 0.0
    %229 = vmatpush1.msra.mxu0 0.0
    %230 = vmatprep.subr.mxu0 0.0
    %231 = vmatpush1.msra.mxu0 0.0
    %232 = vmatprep.subr.mxu0 0.0
    %233 = vmatpush1.msra.mxu0 0.0
    %234 = vmatprep.subr.mxu0 0.0
    %235 = vmatpush1.msra.mxu0 0.0
    %236 = vmatprep.subr.mxu0 0.0
    %237 = vmatpush1.msra.mxu0 0.0
    %238 = vmatprep.subr.mxu0 0.0
    %239 = vmatpush1.msra.mxu0 0.0
    %240 = vmatprep.subr.mxu0 0.0
    %241 = vmatpush1.msra.mxu0 0.0
    %242 = vmatprep.subr.mxu0 0.0
    %243 = vmatpush1.msra.mxu0 0.0
    %244 = vmatprep.subr.mxu0 0.0
    %245 = vmatpush1.msra.mxu0 0.0
    %246 = vmatprep.subr.mxu0 0.0
    %247 = vmatpush1.msra.mxu0 0.0
    %248 = vmatprep.subr.mxu0 0.0
    %249 = vmatpush1.msra.mxu0 0.0
    %250 = vmatprep.subr.mxu0 0.0
    %251 = vmatpush1.msra.mxu0 0.0
    %252 = vmatprep.subr.mxu0 0.0
    %253 = vmatpush1.msra.mxu0 0.0
    %254 = vmatprep.subr.mxu0 0.0
    %255 = vmatpush1.msra.mxu0 0.0
    %256 = vmatprep.subr.mxu0 0.0
    %257 = vmatpush1.msra.mxu0 0.0
    %258 = vmatprep.subr.mxu0 0.0
    %259 = vmatpush1.msra.mxu0 0.0
    %260 = vmatprep.subr.mxu0 0.0
    %261 = vmatpush1.msra.mxu0 0.0
    %262 = vmatprep.subr.mxu0 0.0
    %263 = vmatpush1.msra.mxu0 0.0
    %264 = vmatprep.subr.mxu0 0.0
    %265 = vmatpush1.msra.mxu0 0.0
    %266 = vmatprep.mubr.f32.mxu0 0.0
    %267 = vmatmul.mubr.f32.gmra.mrb[0].mxu0 %v200
    %v268 = vpop.f32.mrb[0].mxu0
    %v269 = vadd.f32 %v196, %v268
    %v270 = vpop.f32.mrb[0].mxu0
    %271 = vdwg.mxu0
    %v272 = vmax.f32 %v269, 0.0
    %v273 = vand.u32 2147483647, %v269
    %v274 = vsub.f32 0.0, %v273
    %v275 = vmul.f32 %v274, 1.442695
    %v276 = vpow.pop %v275
    %v277 = vadd.f32 %v276, 1.0
    %v278 = vlog2.pop %v277
    %v279 = vmul.f32 %v278, 0.6931472
    %v280 = vadd.f32 %v272, %v279
    %v281 = vmul.f32 %v280, %v280
    %v282 = vrcp.pop %v281
    %v283 = vmul.f32 1.0, %v282
    %285 = vrot.lane.b32.xlu0 %v283, 124
    %v286 = vpop.permute.xlu0 %285
    %v288 = vmul.f32 %v269, %v286
    %v289 = vld [vmem:[%s2] sm:$0xff]
    %v290 = vld [vmem:[%s3] sm:$0x1]
    %v291 = vld [vmem:[%s4] sm:$0xff]
    %v292 = vld [vmem:[%s5] sm:$0x1]
    %294 = vset.pattern.permute.xlu0 0
    %295 = vperm.xlu0 %294, %v289
    %v296 = vpop.permute.xlu0 %295
    %v299 = vlaneseq
    %v300 = vshrl.u32 %v299, 7
    %v301 = vsub.s32 0, %v300
    %v302 = vrot.slane %v292, %v301
    %v304 = vsub.f32 %v296, %v302
    %s305 = smul.f32 %s74, -0.5
    %v306 = vstv %s305
    %v307 = vmul.f32 %v306, %v304
    %v308 = vmul.f32 %v307, %v304
    %v309 = vmul.f32 %v308, 1.442695
    %v310 = vpow.pop %v309
    %v311 = vstv %s68
    %v312 = vmul.f32 %v311, %v310
    %314 = vset.pattern.permute.xlu0 0
    %315 = vperm.xlu0 %314, %v291
    %v316 = vpop.permute.xlu0 %315
    %v319 = vlaneseq
    %v320 = vshrl.u32 %v319, 7
    %v321 = vsub.s32 0, %v320
    %v322 = vrot.slane %v290, %v321
    %v324 = vsub.f32 %v316, %v322
    %v325 = vmul.f32 %v306, %v324
    %v326 = vmul.f32 %v325, %v324
    %v327 = vmul.f32 %v326, 1.442695
    %v328 = vpow.pop %v327
    %v329 = vmul.f32 %v311, %v328
    %v330 = vsub.f32 %v316, %v302
    %v331 = vmul.f32 %v306, %v330
    %v332 = vmul.f32 %v331, %v330
    %v333 = vmul.f32 %v332, 1.442695
    %v334 = vpow.pop %v333
    %v335 = vmul.f32 %v311, %v334
    %v336 = vlaneseq
    %v337 = vshrl.u32 %v336, 7
    %v338 = vlaneseq
    %v339 = vand.u32 %v338, 127
    %vm340 = vcmp.eq.s32.totalorder %v337, %v339
    %v341 = vstv %s70
    %v342 = vadd.f32 %v335, %v341
    %v343 = vsel %vm340, %v342, %v335
    %344 = vxpose.xlu0.b32.start [1/16] %v286, 128
    %345 = vxpose.xlu0.b32.cont [2/16] 0.0, 128
    %346 = vxpose.xlu0.b32.cont [3/16] 0.0, 128
    %347 = vxpose.xlu0.b32.cont [4/16] 0.0, 128
    %348 = vxpose.xlu0.b32.cont [5/16] 0.0, 128
    %349 = vxpose.xlu0.b32.cont [6/16] 0.0, 128
    %350 = vxpose.xlu0.b32.cont [7/16] 0.0, 128
    %351 = vxpose.xlu0.b32.cont [8/16] 0.0, 128
    %352 = vxpose.xlu0.b32.cont [9/16] 0.0, 128
    %353 = vxpose.xlu0.b32.cont [10/16] 0.0, 128
    %354 = vxpose.xlu0.b32.cont [11/16] 0.0, 128
    %355 = vxpose.xlu0.b32.cont [12/16] 0.0, 128
    %356 = vxpose.xlu0.b32.cont [13/16] 0.0, 128
    %357 = vxpose.xlu0.b32.cont [14/16] 0.0, 128
    %358 = vxpose.xlu0.b32.cont [15/16] 0.0, 128
    %359 = vxpose.xlu0.b32.end [16/16] 0.0, 128
    %v360 = vpop.trf.xlu0
    %v361 = vpop.trf.xlu0
    %v362 = vpop.trf.xlu0
    %v363 = vpop.trf.xlu0
    %v364 = vpop.trf.xlu0
    %v365 = vpop.trf.xlu0
    %v366 = vpop.trf.xlu0
    %v367 = vpop.trf.xlu0
    %v368 = vpop.trf.xlu0
    %v369 = vpop.trf.xlu0
    %v370 = vpop.trf.xlu0
    %v371 = vpop.trf.xlu0
    %v372 = vpop.trf.xlu0
    %v373 = vpop.trf.xlu0
    %v374 = vpop.trf.xlu0
    %v375 = vpop.trf.xlu0
    %376 = vxpose.xlu0.b32.start [1/16] %v288, 128
    %377 = vxpose.xlu0.b32.cont [2/16] 0.0, 128
    %378 = vxpose.xlu0.b32.cont [3/16] 0.0, 128
    %379 = vxpose.xlu0.b32.cont [4/16] 0.0, 128
    %380 = vxpose.xlu0.b32.cont [5/16] 0.0, 128
    %381 = vxpose.xlu0.b32.cont [6/16] 0.0, 128
    %382 = vxpose.xlu0.b32.cont [7/16] 0.0, 128
    %383 = vxpose.xlu0.b32.cont [8/16] 0.0, 128
    %384 = vxpose.xlu0.b32.cont [9/16] 0.0, 128
    %385 = vxpose.xlu0.b32.cont [10/16] 0.0, 128
    %386 = vxpose.xlu0.b32.cont [11/16] 0.0, 128
    %387 = vxpose.xlu0.b32.cont [12/16] 0.0, 128
    %388 = vxpose.xlu0.b32.cont [13/16] 0.0, 128
    %389 = vxpose.xlu0.b32.cont [14/16] 0.0, 128
    %390 = vxpose.xlu0.b32.cont [15/16] 0.0, 128
    %391 = vxpose.xlu0.b32.end [16/16] 0.0, 128
    %v392 = vpop.trf.xlu0
    %v393 = vpop.trf.xlu0
    %v394 = vpop.trf.xlu0
    %v395 = vpop.trf.xlu0
    %v396 = vpop.trf.xlu0
    %v397 = vpop.trf.xlu0
    %v398 = vpop.trf.xlu0
    %v399 = vpop.trf.xlu0
    %v400 = vpop.trf.xlu0
    %v401 = vpop.trf.xlu0
    %v402 = vpop.trf.xlu0
    %v403 = vpop.trf.xlu0
    %v404 = vpop.trf.xlu0
    %v405 = vpop.trf.xlu0
    %v406 = vpop.trf.xlu0
    %v407 = vpop.trf.xlu0
    %v408 = vstv %s69
    %v409 = vmul.f32 %v408, %v329
    %v410 = vlaneseq
    %v411 = vshrl.u32 %v410, 7
    %v412 = vsub.s32 0, %v411
    %v413 = vrot.slane %v360, %v412
    %415 = vbcast.lane.b32.xlu0 %v413, 256
    %v416 = vpop.permute.xlu0 %415
    %v417 = vlaneseq
    %v418 = vshrl.u32 %v417, 7
    %v419 = vsub.s32 1, %v418
    %v420 = vrot.slane %v360, %v419
    %422 = vbcast.lane.b32.xlu0 %v420, 256
    %v423 = vpop.permute.xlu0 %422
    %v424 = vlaneseq
    %v425 = vshrl.u32 %v424, 7
    %v426 = vsub.s32 2, %v425
    %v427 = vrot.slane %v360, %v426
    %429 = vbcast.lane.b32.xlu0 %v427, 256
    %v430 = vpop.permute.xlu0 %429
    %v431 = vlaneseq
    %v432 = vshrl.u32 %v431, 7
    %v433 = vsub.s32 3, %v432
    %v434 = vrot.slane %v360, %v433
    %436 = vbcast.lane.b32.xlu0 %v434, 256
    %v437 = vpop.permute.xlu0 %436
    %v438 = vmul.f32 %v312, %v416
    %v439 = vmul.f32 %v312, %v423
    %v440 = vmul.f32 %v312, %v430
    %v441 = vmul.f32 %v312, %v437
    %vm442 = vcmask 64512
    %v444 = vsel %vm442, %v409, 0
    %446 = vmatprep.subr.mxu0 0.0
    %447 = vmatpush1.msra.mxu0 %v438
    %448 = vmatprep.subr.mxu0 0.0
    %449 = vmatpush1.msra.mxu0 0.0
    %450 = vmatprep.subr.mxu0 0.0
    %451 = vmatpush1.msra.mxu0 0.0
    %452 = vmatprep.subr.mxu0 0.0
    %453 = vmatpush1.msra.mxu0 0.0
    %454 = vmatprep.subr.mxu0 0.0
    %455 = vmatpush1.msra.mxu0 0.0
    %456 = vmatprep.subr.mxu0 0.0
    %457 = vmatpush1.msra.mxu0 0.0
    %458 = vmatprep.subr.mxu0 0.0
    %459 = vmatpush1.msra.mxu0 0.0
    %460 = vmatprep.subr.mxu0 0.0
    %461 = vmatpush1.msra.mxu0 0.0
    %462 = vmatprep.subr.mxu0 0.0
    %463 = vmatpush1.msra.mxu0 0.0
    %464 = vmatprep.subr.mxu0 0.0
    %465 = vmatpush1.msra.mxu0 0.0
    %466 = vmatprep.subr.mxu0 0.0
    %467 = vmatpush1.msra.mxu0 0.0
    %468 = vmatprep.subr.mxu0 0.0
    %469 = vmatpush1.msra.mxu0 0.0
    %470 = vmatprep.subr.mxu0 0.0
    %471 = vmatpush1.msra.mxu0 0.0
    %472 = vmatprep.subr.mxu0 0.0
    %473 = vmatpush1.msra.mxu0 0.0
    %474 = vmatprep.subr.mxu0 0.0
    %475 = vmatpush1.msra.mxu0 0.0
    %476 = vmatprep.subr.mxu0 0.0
    %477 = vmatpush1.msra.mxu0 0.0
    %478 = vmatprep.subr.mxu0 0.0
    %479 = vmatpush1.msra.mxu0 0.0
    %480 = vmatprep.subr.mxu0 0.0
    %481 = vmatpush1.msra.mxu0 0.0
    %482 = vmatprep.subr.mxu0 0.0
    %483 = vmatpush1.msra.mxu0 0.0
    %484 = vmatprep.subr.mxu0 0.0
    %485 = vmatpush1.msra.mxu0 0.0
    %486 = vmatprep.subr.mxu0 0.0
    %487 = vmatpush1.msra.mxu0 0.0
    %488 = vmatprep.subr.mxu0 0.0
    %489 = vmatpush1.msra.mxu0 0.0
    %490 = vmatprep.subr.mxu0 0.0
    %491 = vmatpush1.msra.mxu0 0.0
    %492 = vmatprep.subr.mxu0 0.0
    %493 = vmatpush1.msra.mxu0 0.0
    %494 = vmatprep.subr.mxu0 0.0
    %495 = vmatpush1.msra.mxu0 0.0
    %496 = vmatprep.subr.mxu0 0.0
    %497 = vmatpush1.msra.mxu0 0.0
    %498 = vmatprep.subr.mxu0 0.0
    %499 = vmatpush1.msra.mxu0 0.0
    %500 = vmatprep.subr.mxu0 0.0
    %501 = vmatpush1.msra.mxu0 0.0
    %502 = vmatprep.subr.mxu0 0.0
    %503 = vmatpush1.msra.mxu0 0.0
    %504 = vmatprep.subr.mxu0 0.0
    %505 = vmatpush1.msra.mxu0 0.0
    %506 = vmatprep.subr.mxu0 0.0
    %507 = vmatpush1.msra.mxu0 0.0
    %508 = vmatprep.subr.mxu0 0.0
    %509 = vmatpush1.msra.mxu0 0.0
    %510 = vmatprep.mubr.f32.mxu0 0.0
    %511 = vmatmul.mubr.f32.gmra.mrb[0].mxu0 %v444
    %v512 = vpop.f32.mrb[0].mxu0
    %v513 = vadd.f32 0.0, %v512
    %v514 = vpop.f32.mrb[0].mxu0
    %515 = vdwg.mxu0
    %516 = vmatprep.subr.mxu0 0.0
    %517 = vmatpush1.msra.mxu0 %v439
    %518 = vmatprep.subr.mxu0 0.0
    %519 = vmatpush1.msra.mxu0 0.0
    %520 = vmatprep.subr.mxu0 0.0
    %521 = vmatpush1.msra.mxu0 0.0
    %522 = vmatprep.subr.mxu0 0.0
    %523 = vmatpush1.msra.mxu0 0.0
    %524 = vmatprep.subr.mxu0 0.0
    %525 = vmatpush1.msra.mxu0 0.0
    %526 = vmatprep.subr.mxu0 0.0
    %527 = vmatpush1.msra.mxu0 0.0
    %528 = vmatprep.subr.mxu0 0.0
    %529 = vmatpush1.msra.mxu0 0.0
    %530 = vmatprep.subr.mxu0 0.0
    %531 = vmatpush1.msra.mxu0 0.0
    %532 = vmatprep.subr.mxu0 0.0
    %533 = vmatpush1.msra.mxu0 0.0
    %534 = vmatprep.subr.mxu0 0.0
    %535 = vmatpush1.msra.mxu0 0.0
    %536 = vmatprep.subr.mxu0 0.0
    %537 = vmatpush1.msra.mxu0 0.0
    %538 = vmatprep.subr.mxu0 0.0
    %539 = vmatpush1.msra.mxu0 0.0
    %540 = vmatprep.subr.mxu0 0.0
    %541 = vmatpush1.msra.mxu0 0.0
    %542 = vmatprep.subr.mxu0 0.0
    %543 = vmatpush1.msra.mxu0 0.0
    %544 = vmatprep.subr.mxu0 0.0
    %545 = vmatpush1.msra.mxu0 0.0
    %546 = vmatprep.subr.mxu0 0.0
    %547 = vmatpush1.msra.mxu0 0.0
    %548 = vmatprep.subr.mxu0 0.0
    %549 = vmatpush1.msra.mxu0 0.0
    %550 = vmatprep.subr.mxu0 0.0
    %551 = vmatpush1.msra.mxu0 0.0
    %552 = vmatprep.subr.mxu0 0.0
    %553 = vmatpush1.msra.mxu0 0.0
    %554 = vmatprep.subr.mxu0 0.0
    %555 = vmatpush1.msra.mxu0 0.0
    %556 = vmatprep.subr.mxu0 0.0
    %557 = vmatpush1.msra.mxu0 0.0
    %558 = vmatprep.subr.mxu0 0.0
    %559 = vmatpush1.msra.mxu0 0.0
    %560 = vmatprep.subr.mxu0 0.0
    %561 = vmatpush1.msra.mxu0 0.0
    %562 = vmatprep.subr.mxu0 0.0
    %563 = vmatpush1.msra.mxu0 0.0
    %564 = vmatprep.subr.mxu0 0.0
    %565 = vmatpush1.msra.mxu0 0.0
    %566 = vmatprep.subr.mxu0 0.0
    %567 = vmatpush1.msra.mxu0 0.0
    %568 = vmatprep.subr.mxu0 0.0
    %569 = vmatpush1.msra.mxu0 0.0
    %570 = vmatprep.subr.mxu0 0.0
    %571 = vmatpush1.msra.mxu0 0.0
    %572 = vmatprep.subr.mxu0 0.0
    %573 = vmatpush1.msra.mxu0 0.0
    %574 = vmatprep.subr.mxu0 0.0
    %575 = vmatpush1.msra.mxu0 0.0
    %576 = vmatprep.subr.mxu0 0.0
    %577 = vmatpush1.msra.mxu0 0.0
    %578 = vmatprep.subr.mxu0 0.0
    %579 = vmatpush1.msra.mxu0 0.0
    %580 = vmatprep.mubr.f32.mxu0 0.0
    %581 = vmatmul.mubr.f32.gmra.mrb[0].mxu0 %v444
    %v582 = vpop.f32.mrb[0].mxu0
    %v583 = vadd.f32 0.0, %v582
    %v584 = vpop.f32.mrb[0].mxu0
    %585 = vdwg.mxu0
    %586 = vmatprep.subr.mxu0 0.0
    %587 = vmatpush1.msra.mxu0 %v440
    %588 = vmatprep.subr.mxu0 0.0
    %589 = vmatpush1.msra.mxu0 0.0
    %590 = vmatprep.subr.mxu0 0.0
    %591 = vmatpush1.msra.mxu0 0.0
    %592 = vmatprep.subr.mxu0 0.0
    %593 = vmatpush1.msra.mxu0 0.0
    %594 = vmatprep.subr.mxu0 0.0
    %595 = vmatpush1.msra.mxu0 0.0
    %596 = vmatprep.subr.mxu0 0.0
    %597 = vmatpush1.msra.mxu0 0.0
    %598 = vmatprep.subr.mxu0 0.0
    %599 = vmatpush1.msra.mxu0 0.0
    %600 = vmatprep.subr.mxu0 0.0
    %601 = vmatpush1.msra.mxu0 0.0
    %602 = vmatprep.subr.mxu0 0.0
    %603 = vmatpush1.msra.mxu0 0.0
    %604 = vmatprep.subr.mxu0 0.0
    %605 = vmatpush1.msra.mxu0 0.0
    %606 = vmatprep.subr.mxu0 0.0
    %607 = vmatpush1.msra.mxu0 0.0
    %608 = vmatprep.subr.mxu0 0.0
    %609 = vmatpush1.msra.mxu0 0.0
    %610 = vmatprep.subr.mxu0 0.0
    %611 = vmatpush1.msra.mxu0 0.0
    %612 = vmatprep.subr.mxu0 0.0
    %613 = vmatpush1.msra.mxu0 0.0
    %614 = vmatprep.subr.mxu0 0.0
    %615 = vmatpush1.msra.mxu0 0.0
    %616 = vmatprep.subr.mxu0 0.0
    %617 = vmatpush1.msra.mxu0 0.0
    %618 = vmatprep.subr.mxu0 0.0
    %619 = vmatpush1.msra.mxu0 0.0
    %620 = vmatprep.subr.mxu0 0.0
    %621 = vmatpush1.msra.mxu0 0.0
    %622 = vmatprep.subr.mxu0 0.0
    %623 = vmatpush1.msra.mxu0 0.0
    %624 = vmatprep.subr.mxu0 0.0
    %625 = vmatpush1.msra.mxu0 0.0
    %626 = vmatprep.subr.mxu0 0.0
    %627 = vmatpush1.msra.mxu0 0.0
    %628 = vmatprep.subr.mxu0 0.0
    %629 = vmatpush1.msra.mxu0 0.0
    %630 = vmatprep.subr.mxu0 0.0
    %631 = vmatpush1.msra.mxu0 0.0
    %632 = vmatprep.subr.mxu0 0.0
    %633 = vmatpush1.msra.mxu0 0.0
    %634 = vmatprep.subr.mxu0 0.0
    %635 = vmatpush1.msra.mxu0 0.0
    %636 = vmatprep.subr.mxu0 0.0
    %637 = vmatpush1.msra.mxu0 0.0
    %638 = vmatprep.subr.mxu0 0.0
    %639 = vmatpush1.msra.mxu0 0.0
    %640 = vmatprep.subr.mxu0 0.0
    %641 = vmatpush1.msra.mxu0 0.0
    %642 = vmatprep.subr.mxu0 0.0
    %643 = vmatpush1.msra.mxu0 0.0
    %644 = vmatprep.subr.mxu0 0.0
    %645 = vmatpush1.msra.mxu0 0.0
    %646 = vmatprep.subr.mxu0 0.0
    %647 = vmatpush1.msra.mxu0 0.0
    %648 = vmatprep.subr.mxu0 0.0
    %649 = vmatpush1.msra.mxu0 0.0
    %650 = vmatprep.mubr.f32.mxu0 0.0
    %651 = vmatmul.mubr.f32.gmra.mrb[0].mxu0 %v444
    %v652 = vpop.f32.mrb[0].mxu0
    %v653 = vadd.f32 0.0, %v652
    %v654 = vpop.f32.mrb[0].mxu0
    %655 = vdwg.mxu0
    %656 = vmatprep.subr.mxu0 0.0
    %657 = vmatpush1.msra.mxu0 %v441
    %658 = vmatprep.subr.mxu0 0.0
    %659 = vmatpush1.msra.mxu0 0.0
    %660 = vmatprep.subr.mxu0 0.0
    %661 = vmatpush1.msra.mxu0 0.0
    %662 = vmatprep.subr.mxu0 0.0
    %663 = vmatpush1.msra.mxu0 0.0
    %664 = vmatprep.subr.mxu0 0.0
    %665 = vmatpush1.msra.mxu0 0.0
    %666 = vmatprep.subr.mxu0 0.0
    %667 = vmatpush1.msra.mxu0 0.0
    %668 = vmatprep.subr.mxu0 0.0
    %669 = vmatpush1.msra.mxu0 0.0
    %670 = vmatprep.subr.mxu0 0.0
    %671 = vmatpush1.msra.mxu0 0.0
    %672 = vmatprep.subr.mxu0 0.0
    %673 = vmatpush1.msra.mxu0 0.0
    %674 = vmatprep.subr.mxu0 0.0
    %675 = vmatpush1.msra.mxu0 0.0
    %676 = vmatprep.subr.mxu0 0.0
    %677 = vmatpush1.msra.mxu0 0.0
    %678 = vmatprep.subr.mxu0 0.0
    %679 = vmatpush1.msra.mxu0 0.0
    %680 = vmatprep.subr.mxu0 0.0
    %681 = vmatpush1.msra.mxu0 0.0
    %682 = vmatprep.subr.mxu0 0.0
    %683 = vmatpush1.msra.mxu0 0.0
    %684 = vmatprep.subr.mxu0 0.0
    %685 = vmatpush1.msra.mxu0 0.0
    %686 = vmatprep.subr.mxu0 0.0
    %687 = vmatpush1.msra.mxu0 0.0
    %688 = vmatprep.subr.mxu0 0.0
    %689 = vmatpush1.msra.mxu0 0.0
    %690 = vmatprep.subr.mxu0 0.0
    %691 = vmatpush1.msra.mxu0 0.0
    %692 = vmatprep.subr.mxu0 0.0
    %693 = vmatpush1.msra.mxu0 0.0
    %694 = vmatprep.subr.mxu0 0.0
    %695 = vmatpush1.msra.mxu0 0.0
    %696 = vmatprep.subr.mxu0 0.0
    %697 = vmatpush1.msra.mxu0 0.0
    %698 = vmatprep.subr.mxu0 0.0
    %699 = vmatpush1.msra.mxu0 0.0
    %700 = vmatprep.subr.mxu0 0.0
    %701 = vmatpush1.msra.mxu0 0.0
    %702 = vmatprep.subr.mxu0 0.0
    %703 = vmatpush1.msra.mxu0 0.0
    %704 = vmatprep.subr.mxu0 0.0
    %705 = vmatpush1.msra.mxu0 0.0
    %706 = vmatprep.subr.mxu0 0.0
    %707 = vmatpush1.msra.mxu0 0.0
    %708 = vmatprep.subr.mxu0 0.0
    %709 = vmatpush1.msra.mxu0 0.0
    %710 = vmatprep.subr.mxu0 0.0
    %711 = vmatpush1.msra.mxu0 0.0
    %712 = vmatprep.subr.mxu0 0.0
    %713 = vmatpush1.msra.mxu0 0.0
    %714 = vmatprep.subr.mxu0 0.0
    %715 = vmatpush1.msra.mxu0 0.0
    %716 = vmatprep.subr.mxu0 0.0
    %717 = vmatpush1.msra.mxu0 0.0
    %718 = vmatprep.subr.mxu0 0.0
    %719 = vmatpush1.msra.mxu0 0.0
    %720 = vmatprep.mubr.f32.mxu0 0.0
    %721 = vmatmul.mubr.f32.gmra.mrb[0].mxu0 %v444
    %v722 = vpop.f32.mrb[0].mxu0
    %v723 = vadd.f32 0.0, %v722
    %v724 = vpop.f32.mrb[0].mxu0
    %725 = vdwg.mxu0
    %v726 = vadd.f32 %v343, %v513
    %v727 = vadd.f32 %v343, %v583
    %v728 = vadd.f32 %v343, %v653
    %v729 = vadd.f32 %v343, %v723
    %v730 = vrcp.pop %v343
    %v731 = vmul.f32 1.0, %v730
    %v732 = vrcp.pop %v726
    %v733 = vmul.f32 1.0, %v732
    %v734 = vrcp.pop %v727
    %v735 = vmul.f32 1.0, %v734
    %v736 = vrcp.pop %v728
    %v737 = vmul.f32 1.0, %v736
    %v738 = vrcp.pop %v729
    %v739 = vmul.f32 1.0, %v738
    %741 = vset.pattern.permute.xlu0 0
    %742 = vperm.xlu0 %741, %v731
    %v743 = vpop.permute.xlu0 %742
    %746 = vset.pattern.permute.xlu0 0
    %747 = vperm.xlu0 %746, %v733
    %v748 = vpop.permute.xlu0 %747
    %751 = vset.pattern.permute.xlu0 0
    %752 = vperm.xlu0 %751, %v735
    %v753 = vpop.permute.xlu0 %752
    %756 = vset.pattern.permute.xlu0 0
    %757 = vperm.xlu0 %756, %v737
    %v758 = vpop.permute.xlu0 %757
    %761 = vset.pattern.permute.xlu0 0
    %762 = vperm.xlu0 %761, %v739
    %v763 = vpop.permute.xlu0 %762
    %v765 = vmul.f32 %v343, %v743
    %v766 = vmul.f32 %v726, %v748
    %v767 = vmul.f32 %v727, %v753
    %v768 = vmul.f32 %v728, %v758
    %v769 = vmul.f32 %v729, %v763
    %v770 = vmul.f32 %v329, %v743
    %v771 = vmul.f32 %v329, %v748
    %v772 = vmul.f32 %v329, %v753
    %v773 = vmul.f32 %v329, %v758
    %v774 = vmul.f32 %v329, %v763
    %vm775 = vcmp.eq.s32.totalorder %v337, 0
    %777 = vset.pattern.permute.xlu0 0
    %778 = vperm.xlu0 %777, %v343
    %v779 = vpop.permute.xlu0 %778
    %782 = vset.pattern.permute.xlu0 0
    %783 = vperm.xlu0 %782, %v726
    %v784 = vpop.permute.xlu0 %783
    %787 = vset.pattern.permute.xlu0 0
    %788 = vperm.xlu0 %787, %v727
    %v789 = vpop.permute.xlu0 %788
    %792 = vset.pattern.permute.xlu0 0
    %793 = vperm.xlu0 %792, %v728
    %v794 = vpop.permute.xlu0 %793
    %797 = vset.pattern.permute.xlu0 0
    %798 = vperm.xlu0 %797, %v729
    %v799 = vpop.permute.xlu0 %798
    %v801 = vlaneseq
    %v802 = vshrl.u32 %v801, 7
    %v803 = vsub.s32 0, %v802
    %v804 = vrot.slane %v765, %v803
    %v805 = vlaneseq
    %v806 = vshrl.u32 %v805, 7
    %v807 = vsub.s32 0, %v806
    %v808 = vrot.slane %v766, %v807
    %v809 = vlaneseq
    %v810 = vshrl.u32 %v809, 7
    %v811 = vsub.s32 0, %v810
    %v812 = vrot.slane %v767, %v811
    %v813 = vlaneseq
    %v814 = vshrl.u32 %v813, 7
    %v815 = vsub.s32 0, %v814
    %v816 = vrot.slane %v768, %v815
    %v817 = vlaneseq
    %v818 = vshrl.u32 %v817, 7
    %v819 = vsub.s32 0, %v818
    %v820 = vrot.slane %v769, %v819
    %v821 = vmul.f32 %v779, %v804
    %v822 = vmul.f32 %v784, %v808
    %v823 = vmul.f32 %v789, %v812
    %v824 = vmul.f32 %v794, %v816
    %v825 = vmul.f32 %v799, %v820
    %v826 = vsub.f32 %v343, %v821
    %v827 = vsub.f32 %v726, %v822
    %v828 = vsub.f32 %v727, %v823
    %v829 = vsub.f32 %v728, %v824
    %v830 = vsub.f32 %v729, %v825
    %v831 = vsel %vm775, 1, 0
    %vm832 = vcmp.eq.s32.totalorder %v831, 1
    %v833 = vsel %vm832, %v804, %v826
    %v834 = vsel %vm832, %v808, %v827
    %v835 = vsel %vm832, %v812, %v828
    %v836 = vsel %vm832, %v816, %v829
    %v837 = vsel %vm832, %v820, %v830
    %v838 = vlaneseq
    %v839 = vshrl.u32 %v838, 7
    %v840 = vsub.s32 0, %v839
    %v841 = vrot.slane %v770, %v840
    %v842 = vlaneseq
    %v843 = vshrl.u32 %v842, 7
    %v844 = vsub.s32 0, %v843
    %v845 = vrot.slane %v771, %v844
    %v846 = vlaneseq
    %v847 = vshrl.u32 %v846, 7
    %v848 = vsub.s32 0, %v847
    %v849 = vrot.slane %v772, %v848
    %v850 = vlaneseq
    %v851 = vshrl.u32 %v850, 7
    %v852 = vsub.s32 0, %v851
    %v853 = vrot.slane %v773, %v852
    %v854 = vlaneseq
    %v855 = vshrl.u32 %v854, 7
    %v856 = vsub.s32 0, %v855
    %v857 = vrot.slane %v774, %v856
    %v858 = vmul.f32 %v779, %v841
    %v859 = vmul.f32 %v784, %v845
    %v860 = vmul.f32 %v789, %v849
    %v861 = vmul.f32 %v794, %v853
    %v862 = vmul.f32 %v799, %v857
    %v863 = vsub.f32 %v329, %v858
    %v864 = vsub.f32 %v329, %v859
    %v865 = vsub.f32 %v329, %v860
    %v866 = vsub.f32 %v329, %v861
    %v867 = vsub.f32 %v329, %v862
    %v868 = vsel %vm832, %v841, %v863
    %v869 = vsel %vm832, %v845, %v864
    %v870 = vsel %vm832, %v849, %v865
    %v871 = vsel %vm832, %v853, %v866
    %v872 = vsel %vm832, %v857, %v867
    %v873 = vrcp.pop %v833
    %v874 = vmul.f32 1.0, %v873
    %v875 = vrcp.pop %v834
    %v876 = vmul.f32 1.0, %v875
    %v877 = vrcp.pop %v835
    %v878 = vmul.f32 1.0, %v877
    %v879 = vrcp.pop %v836
    %v880 = vmul.f32 1.0, %v879
    %v881 = vrcp.pop %v837
    %v882 = vmul.f32 1.0, %v881
    %884 = vset.pattern.permute.xlu0 1
    %885 = vperm.xlu0 %884, %v874
    %v886 = vpop.permute.xlu0 %885
    %889 = vset.pattern.permute.xlu0 1
    %890 = vperm.xlu0 %889, %v876
    %v891 = vpop.permute.xlu0 %890
    %894 = vset.pattern.permute.xlu0 1
    %895 = vperm.xlu0 %894, %v878
    %v896 = vpop.permute.xlu0 %895
    %899 = vset.pattern.permute.xlu0 1
    %900 = vperm.xlu0 %899, %v880
    %v901 = vpop.permute.xlu0 %900
    %904 = vset.pattern.permute.xlu0 1
    %905 = vperm.xlu0 %904, %v882
    %v906 = vpop.permute.xlu0 %905
    %v908 = vmul.f32 %v833, %v886
    %v909 = vmul.f32 %v834, %v891
    %v910 = vmul.f32 %v835, %v896
    %v911 = vmul.f32 %v836, %v901
    %v912 = vmul.f32 %v837, %v906
    %v913 = vmul.f32 %v868, %v886
    %v914 = vmul.f32 %v869, %v891
    %v915 = vmul.f32 %v870, %v896
    %v916 = vmul.f32 %v871, %v901
    %v917 = vmul.f32 %v872, %v906
    %vm918 = vcmp.eq.s32.totalorder %v337, 1
    %920 = vset.pattern.permute.xlu0 1
    %921 = vperm.xlu0 %920, %v833
    %v922 = vpop.permute.xlu0 %921
    %925 = vset.pattern.permute.xlu0 1
    %926 = vperm.xlu0 %925, %v834
    %v927 = vpop.permute.xlu0 %926
    %930 = vset.pattern.permute.xlu0 1
    %931 = vperm.xlu0 %930, %v835
    %v932 = vpop.permute.xlu0 %931
    %935 = vset.pattern.permute.xlu0 1
    %936 = vperm.xlu0 %935, %v836
    %v937 = vpop.permute.xlu0 %936
    %940 = vset.pattern.permute.xlu0 1
    %941 = vperm.xlu0 %940, %v837
    %v942 = vpop.permute.xlu0 %941
    %v944 = vlaneseq
    %v945 = vshrl.u32 %v944, 7
    %v946 = vsub.s32 1, %v945
    %v947 = vrot.slane %v908, %v946
    %v948 = vlaneseq
    %v949 = vshrl.u32 %v948, 7
    %v950 = vsub.s32 1, %v949
    %v951 = vrot.slane %v909, %v950
    %v952 = vlaneseq
    %v953 = vshrl.u32 %v952, 7
    %v954 = vsub.s32 1, %v953
    %v955 = vrot.slane %v910, %v954
    %v956 = vlaneseq
    %v957 = vshrl.u32 %v956, 7
    %v958 = vsub.s32 1, %v957
    %v959 = vrot.slane %v911, %v958
    %v960 = vlaneseq
    %v961 = vshrl.u32 %v960, 7
    %v962 = vsub.s32 1, %v961
    %v963 = vrot.slane %v912, %v962
    %v964 = vmul.f32 %v922, %v947
    %v965 = vmul.f32 %v927, %v951
    %v966 = vmul.f32 %v932, %v955
    %v967 = vmul.f32 %v937, %v959
    %v968 = vmul.f32 %v942, %v963
    %v969 = vsub.f32 %v833, %v964
    %v970 = vsub.f32 %v834, %v965
    %v971 = vsub.f32 %v835, %v966
    %v972 = vsub.f32 %v836, %v967
    %v973 = vsub.f32 %v837, %v968
    %v974 = vsel %vm918, 1, 0
    %vm975 = vcmp.eq.s32.totalorder %v974, 1
    %v976 = vsel %vm975, %v947, %v969
    %v977 = vsel %vm975, %v951, %v970
    %v978 = vsel %vm975, %v955, %v971
    %v979 = vsel %vm975, %v959, %v972
    %v980 = vsel %vm975, %v963, %v973
    %v981 = vlaneseq
    %v982 = vshrl.u32 %v981, 7
    %v983 = vsub.s32 1, %v982
    %v984 = vrot.slane %v913, %v983
    %v985 = vlaneseq
    %v986 = vshrl.u32 %v985, 7
    %v987 = vsub.s32 1, %v986
    %v988 = vrot.slane %v914, %v987
    %v989 = vlaneseq
    %v990 = vshrl.u32 %v989, 7
    %v991 = vsub.s32 1, %v990
    %v992 = vrot.slane %v915, %v991
    %v993 = vlaneseq
    %v994 = vshrl.u32 %v993, 7
    %v995 = vsub.s32 1, %v994
    %v996 = vrot.slane %v916, %v995
    %v997 = vlaneseq
    %v998 = vshrl.u32 %v997, 7
    %v999 = vsub.s32 1, %v998
    %v1000 = vrot.slane %v917, %v999
    %v1001 = vmul.f32 %v922, %v984
    %v1002 = vmul.f32 %v927, %v988
    %v1003 = vmul.f32 %v932, %v992
    %v1004 = vmul.f32 %v937, %v996
    %v1005 = vmul.f32 %v942, %v1000
    %v1006 = vsub.f32 %v868, %v1001
    %v1007 = vsub.f32 %v869, %v1002
    %v1008 = vsub.f32 %v870, %v1003
    %v1009 = vsub.f32 %v871, %v1004
    %v1010 = vsub.f32 %v872, %v1005
    %v1011 = vsel %vm975, %v984, %v1006
    %v1012 = vsel %vm975, %v988, %v1007
    %v1013 = vsel %vm975, %v992, %v1008
    %v1014 = vsel %vm975, %v996, %v1009
    %v1015 = vsel %vm975, %v1000, %v1010
    %v1016 = vrcp.pop %v976
    %v1017 = vmul.f32 1.0, %v1016
    %v1018 = vrcp.pop %v977
    %v1019 = vmul.f32 1.0, %v1018
    %v1020 = vrcp.pop %v978
    %v1021 = vmul.f32 1.0, %v1020
    %v1022 = vrcp.pop %v979
    %v1023 = vmul.f32 1.0, %v1022
    %v1024 = vrcp.pop %v980
    %v1025 = vmul.f32 1.0, %v1024
    %1027 = vset.pattern.permute.xlu0 2
    %1028 = vperm.xlu0 %1027, %v1017
    %v1029 = vpop.permute.xlu0 %1028
    %1032 = vset.pattern.permute.xlu0 2
    %1033 = vperm.xlu0 %1032, %v1019
    %v1034 = vpop.permute.xlu0 %1033
    %1037 = vset.pattern.permute.xlu0 2
    %1038 = vperm.xlu0 %1037, %v1021
    %v1039 = vpop.permute.xlu0 %1038
    %1042 = vset.pattern.permute.xlu0 2
    %1043 = vperm.xlu0 %1042, %v1023
    %v1044 = vpop.permute.xlu0 %1043
    %1047 = vset.pattern.permute.xlu0 2
    %1048 = vperm.xlu0 %1047, %v1025
    %v1049 = vpop.permute.xlu0 %1048
    %v1051 = vmul.f32 %v976, %v1029
    %v1052 = vmul.f32 %v977, %v1034
    %v1053 = vmul.f32 %v978, %v1039
    %v1054 = vmul.f32 %v979, %v1044
    %v1055 = vmul.f32 %v980, %v1049
    %v1056 = vmul.f32 %v1011, %v1029
    %v1057 = vmul.f32 %v1012, %v1034
    %v1058 = vmul.f32 %v1013, %v1039
    %v1059 = vmul.f32 %v1014, %v1044
    %v1060 = vmul.f32 %v1015, %v1049
    %vm1061 = vcmp.eq.s32.totalorder %v337, 2
    %1063 = vset.pattern.permute.xlu0 2
    %1064 = vperm.xlu0 %1063, %v976
    %v1065 = vpop.permute.xlu0 %1064
    %1068 = vset.pattern.permute.xlu0 2
    %1069 = vperm.xlu0 %1068, %v977
    %v1070 = vpop.permute.xlu0 %1069
    %1073 = vset.pattern.permute.xlu0 2
    %1074 = vperm.xlu0 %1073, %v978
    %v1075 = vpop.permute.xlu0 %1074
    %1078 = vset.pattern.permute.xlu0 2
    %1079 = vperm.xlu0 %1078, %v979
    %v1080 = vpop.permute.xlu0 %1079
    %1083 = vset.pattern.permute.xlu0 2
    %1084 = vperm.xlu0 %1083, %v980
    %v1085 = vpop.permute.xlu0 %1084
    %v1087 = vlaneseq
    %v1088 = vshrl.u32 %v1087, 7
    %v1089 = vsub.s32 2, %v1088
    %v1090 = vrot.slane %v1051, %v1089
    %v1091 = vlaneseq
    %v1092 = vshrl.u32 %v1091, 7
    %v1093 = vsub.s32 2, %v1092
    %v1094 = vrot.slane %v1052, %v1093
    %v1095 = vlaneseq
    %v1096 = vshrl.u32 %v1095, 7
    %v1097 = vsub.s32 2, %v1096
    %v1098 = vrot.slane %v1053, %v1097
    %v1099 = vlaneseq
    %v1100 = vshrl.u32 %v1099, 7
    %v1101 = vsub.s32 2, %v1100
    %v1102 = vrot.slane %v1054, %v1101
    %v1103 = vlaneseq
    %v1104 = vshrl.u32 %v1103, 7
    %v1105 = vsub.s32 2, %v1104
    %v1106 = vrot.slane %v1055, %v1105
    %v1107 = vmul.f32 %v1065, %v1090
    %v1108 = vmul.f32 %v1070, %v1094
    %v1109 = vmul.f32 %v1075, %v1098
    %v1110 = vmul.f32 %v1080, %v1102
    %v1111 = vmul.f32 %v1085, %v1106
    %v1112 = vsub.f32 %v976, %v1107
    %v1113 = vsub.f32 %v977, %v1108
    %v1114 = vsub.f32 %v978, %v1109
    %v1115 = vsub.f32 %v979, %v1110
    %v1116 = vsub.f32 %v980, %v1111
    %v1117 = vsel %vm1061, 1, 0
    %vm1118 = vcmp.eq.s32.totalorder %v1117, 1
    %v1119 = vsel %vm1118, %v1090, %v1112
    %v1120 = vsel %vm1118, %v1094, %v1113
    %v1121 = vsel %vm1118, %v1098, %v1114
    %v1122 = vsel %vm1118, %v1102, %v1115
    %v1123 = vsel %vm1118, %v1106, %v1116
    %v1124 = vlaneseq
    %v1125 = vshrl.u32 %v1124, 7
    %v1126 = vsub.s32 2, %v1125
    %v1127 = vrot.slane %v1056, %v1126
    %v1128 = vlaneseq
    %v1129 = vshrl.u32 %v1128, 7
    %v1130 = vsub.s32 2, %v1129
    %v1131 = vrot.slane %v1057, %v1130
    %v1132 = vlaneseq
    %v1133 = vshrl.u32 %v1132, 7
    %v1134 = vsub.s32 2, %v1133
    %v1135 = vrot.slane %v1058, %v1134
    %v1136 = vlaneseq
    %v1137 = vshrl.u32 %v1136, 7
    %v1138 = vsub.s32 2, %v1137
    %v1139 = vrot.slane %v1059, %v1138
    %v1140 = vlaneseq
    %v1141 = vshrl.u32 %v1140, 7
    %v1142 = vsub.s32 2, %v1141
    %v1143 = vrot.slane %v1060, %v1142
    %v1144 = vmul.f32 %v1065, %v1127
    %v1145 = vmul.f32 %v1070, %v1131
    %v1146 = vmul.f32 %v1075, %v1135
    %v1147 = vmul.f32 %v1080, %v1139
    %v1148 = vmul.f32 %v1085, %v1143
    %v1149 = vsub.f32 %v1011, %v1144
    %v1150 = vsub.f32 %v1012, %v1145
    %v1151 = vsub.f32 %v1013, %v1146
    %v1152 = vsub.f32 %v1014, %v1147
    %v1153 = vsub.f32 %v1015, %v1148
    %v1154 = vsel %vm1118, %v1127, %v1149
    %v1155 = vsel %vm1118, %v1131, %v1150
    %v1156 = vsel %vm1118, %v1135, %v1151
    %v1157 = vsel %vm1118, %v1139, %v1152
    %v1158 = vsel %vm1118, %v1143, %v1153
    %v1159 = vrcp.pop %v1119
    %v1160 = vmul.f32 1.0, %v1159
    %v1161 = vrcp.pop %v1120
    %v1162 = vmul.f32 1.0, %v1161
    %v1163 = vrcp.pop %v1121
    %v1164 = vmul.f32 1.0, %v1163
    %v1165 = vrcp.pop %v1122
    %v1166 = vmul.f32 1.0, %v1165
    %v1167 = vrcp.pop %v1123
    %v1168 = vmul.f32 1.0, %v1167
    %1170 = vset.pattern.permute.xlu0 3
    %1171 = vperm.xlu0 %1170, %v1160
    %v1172 = vpop.permute.xlu0 %1171
    %1175 = vset.pattern.permute.xlu0 3
    %1176 = vperm.xlu0 %1175, %v1162
    %v1177 = vpop.permute.xlu0 %1176
    %1180 = vset.pattern.permute.xlu0 3
    %1181 = vperm.xlu0 %1180, %v1164
    %v1182 = vpop.permute.xlu0 %1181
    %1185 = vset.pattern.permute.xlu0 3
    %1186 = vperm.xlu0 %1185, %v1166
    %v1187 = vpop.permute.xlu0 %1186
    %1190 = vset.pattern.permute.xlu0 3
    %1191 = vperm.xlu0 %1190, %v1168
    %v1192 = vpop.permute.xlu0 %1191
    %v1194 = vmul.f32 %v1119, %v1172
    %v1195 = vmul.f32 %v1120, %v1177
    %v1196 = vmul.f32 %v1121, %v1182
    %v1197 = vmul.f32 %v1122, %v1187
    %v1198 = vmul.f32 %v1123, %v1192
    %v1199 = vmul.f32 %v1154, %v1172
    %v1200 = vmul.f32 %v1155, %v1177
    %v1201 = vmul.f32 %v1156, %v1182
    %v1202 = vmul.f32 %v1157, %v1187
    %v1203 = vmul.f32 %v1158, %v1192
    %vm1204 = vcmp.eq.s32.totalorder %v337, 3
    %1206 = vset.pattern.permute.xlu0 3
    %1207 = vperm.xlu0 %1206, %v1119
    %v1208 = vpop.permute.xlu0 %1207
    %1211 = vset.pattern.permute.xlu0 3
    %1212 = vperm.xlu0 %1211, %v1120
    %v1213 = vpop.permute.xlu0 %1212
    %1216 = vset.pattern.permute.xlu0 3
    %1217 = vperm.xlu0 %1216, %v1121
    %v1218 = vpop.permute.xlu0 %1217
    %1221 = vset.pattern.permute.xlu0 3
    %1222 = vperm.xlu0 %1221, %v1122
    %v1223 = vpop.permute.xlu0 %1222
    %1226 = vset.pattern.permute.xlu0 3
    %1227 = vperm.xlu0 %1226, %v1123
    %v1228 = vpop.permute.xlu0 %1227
    %v1230 = vlaneseq
    %v1231 = vshrl.u32 %v1230, 7
    %v1232 = vsub.s32 3, %v1231
    %v1233 = vrot.slane %v1194, %v1232
    %v1234 = vlaneseq
    %v1235 = vshrl.u32 %v1234, 7
    %v1236 = vsub.s32 3, %v1235
    %v1237 = vrot.slane %v1195, %v1236
    %v1238 = vlaneseq
    %v1239 = vshrl.u32 %v1238, 7
    %v1240 = vsub.s32 3, %v1239
    %v1241 = vrot.slane %v1196, %v1240
    %v1242 = vlaneseq
    %v1243 = vshrl.u32 %v1242, 7
    %v1244 = vsub.s32 3, %v1243
    %v1245 = vrot.slane %v1197, %v1244
    %v1246 = vlaneseq
    %v1247 = vshrl.u32 %v1246, 7
    %v1248 = vsub.s32 3, %v1247
    %v1249 = vrot.slane %v1198, %v1248
    %v1250 = vmul.f32 %v1208, %v1233
    %v1251 = vmul.f32 %v1213, %v1237
    %v1252 = vmul.f32 %v1218, %v1241
    %v1253 = vmul.f32 %v1223, %v1245
    %v1254 = vmul.f32 %v1228, %v1249
    %v1255 = vsub.f32 %v1119, %v1250
    %v1256 = vsub.f32 %v1120, %v1251
    %v1257 = vsub.f32 %v1121, %v1252
    %v1258 = vsub.f32 %v1122, %v1253
    %v1259 = vsub.f32 %v1123, %v1254
    %v1260 = vsel %vm1204, 1, 0
    %vm1261 = vcmp.eq.s32.totalorder %v1260, 1
    %v1262 = vsel %vm1261, %v1233, %v1255
    %v1263 = vsel %vm1261, %v1237, %v1256
    %v1264 = vsel %vm1261, %v1241, %v1257
    %v1265 = vsel %vm1261, %v1245, %v1258
    %v1266 = vsel %vm1261, %v1249, %v1259
    %v1267 = vlaneseq
    %v1268 = vshrl.u32 %v1267, 7
    %v1269 = vsub.s32 3, %v1268
    %v1270 = vrot.slane %v1199, %v1269
    %v1271 = vlaneseq
    %v1272 = vshrl.u32 %v1271, 7
    %v1273 = vsub.s32 3, %v1272
    %v1274 = vrot.slane %v1200, %v1273
    %v1275 = vlaneseq
    %v1276 = vshrl.u32 %v1275, 7
    %v1277 = vsub.s32 3, %v1276
    %v1278 = vrot.slane %v1201, %v1277
    %v1279 = vlaneseq
    %v1280 = vshrl.u32 %v1279, 7
    %v1281 = vsub.s32 3, %v1280
    %v1282 = vrot.slane %v1202, %v1281
    %v1283 = vlaneseq
    %v1284 = vshrl.u32 %v1283, 7
    %v1285 = vsub.s32 3, %v1284
    %v1286 = vrot.slane %v1203, %v1285
    %v1287 = vmul.f32 %v1208, %v1270
    %v1288 = vmul.f32 %v1213, %v1274
    %v1289 = vmul.f32 %v1218, %v1278
    %v1290 = vmul.f32 %v1223, %v1282
    %v1291 = vmul.f32 %v1228, %v1286
    %v1292 = vsub.f32 %v1154, %v1287
    %v1293 = vsub.f32 %v1155, %v1288
    %v1294 = vsub.f32 %v1156, %v1289
    %v1295 = vsub.f32 %v1157, %v1290
    %v1296 = vsub.f32 %v1158, %v1291
    %v1297 = vsel %vm1261, %v1270, %v1292
    %v1298 = vsel %vm1261, %v1274, %v1293
    %v1299 = vsel %vm1261, %v1278, %v1294
    %v1300 = vsel %vm1261, %v1282, %v1295
    %v1301 = vsel %vm1261, %v1286, %v1296
    %v1302 = vrcp.pop %v1262
    %v1303 = vmul.f32 1.0, %v1302
    %v1304 = vrcp.pop %v1263
    %v1305 = vmul.f32 1.0, %v1304
    %v1306 = vrcp.pop %v1264
    %v1307 = vmul.f32 1.0, %v1306
    %v1308 = vrcp.pop %v1265
    %v1309 = vmul.f32 1.0, %v1308
    %v1310 = vrcp.pop %v1266
    %v1311 = vmul.f32 1.0, %v1310
    %1313 = vset.pattern.permute.xlu0 4
    %1314 = vperm.xlu0 %1313, %v1303
    %v1315 = vpop.permute.xlu0 %1314
    %1318 = vset.pattern.permute.xlu0 4
    %1319 = vperm.xlu0 %1318, %v1305
    %v1320 = vpop.permute.xlu0 %1319
    %1323 = vset.pattern.permute.xlu0 4
    %1324 = vperm.xlu0 %1323, %v1307
    %v1325 = vpop.permute.xlu0 %1324
    %1328 = vset.pattern.permute.xlu0 4
    %1329 = vperm.xlu0 %1328, %v1309
    %v1330 = vpop.permute.xlu0 %1329
    %1333 = vset.pattern.permute.xlu0 4
    %1334 = vperm.xlu0 %1333, %v1311
    %v1335 = vpop.permute.xlu0 %1334
    %v1337 = vmul.f32 %v1262, %v1315
    %v1338 = vmul.f32 %v1263, %v1320
    %v1339 = vmul.f32 %v1264, %v1325
    %v1340 = vmul.f32 %v1265, %v1330
    %v1341 = vmul.f32 %v1266, %v1335
    %v1342 = vmul.f32 %v1297, %v1315
    %v1343 = vmul.f32 %v1298, %v1320
    %v1344 = vmul.f32 %v1299, %v1325
    %v1345 = vmul.f32 %v1300, %v1330
    %v1346 = vmul.f32 %v1301, %v1335
    %vm1347 = vcmp.eq.s32.totalorder %v337, 4
    %1349 = vset.pattern.permute.xlu0 4
    %1350 = vperm.xlu0 %1349, %v1262
    %v1351 = vpop.permute.xlu0 %1350
    %1354 = vset.pattern.permute.xlu0 4
    %1355 = vperm.xlu0 %1354, %v1263
    %v1356 = vpop.permute.xlu0 %1355
    %1359 = vset.pattern.permute.xlu0 4
    %1360 = vperm.xlu0 %1359, %v1264
    %v1361 = vpop.permute.xlu0 %1360
    %1364 = vset.pattern.permute.xlu0 4
    %1365 = vperm.xlu0 %1364, %v1265
    %v1366 = vpop.permute.xlu0 %1365
    %1369 = vset.pattern.permute.xlu0 4
    %1370 = vperm.xlu0 %1369, %v1266
    %v1371 = vpop.permute.xlu0 %1370
    %v1373 = vlaneseq
    %v1374 = vshrl.u32 %v1373, 7
    %v1375 = vsub.s32 4, %v1374
    %v1376 = vrot.slane %v1337, %v1375
    %v1377 = vlaneseq
    %v1378 = vshrl.u32 %v1377, 7
    %v1379 = vsub.s32 4, %v1378
    %v1380 = vrot.slane %v1338, %v1379
    %v1381 = vlaneseq
    %v1382 = vshrl.u32 %v1381, 7
    %v1383 = vsub.s32 4, %v1382
    %v1384 = vrot.slane %v1339, %v1383
    %v1385 = vlaneseq
    %v1386 = vshrl.u32 %v1385, 7
    %v1387 = vsub.s32 4, %v1386
    %v1388 = vrot.slane %v1340, %v1387
    %v1389 = vlaneseq
    %v1390 = vshrl.u32 %v1389, 7
    %v1391 = vsub.s32 4, %v1390
    %v1392 = vrot.slane %v1341, %v1391
    %v1393 = vmul.f32 %v1351, %v1376
    %v1394 = vmul.f32 %v1356, %v1380
    %v1395 = vmul.f32 %v1361, %v1384
    %v1396 = vmul.f32 %v1366, %v1388
    %v1397 = vmul.f32 %v1371, %v1392
    %v1398 = vsub.f32 %v1262, %v1393
    %v1399 = vsub.f32 %v1263, %v1394
    %v1400 = vsub.f32 %v1264, %v1395
    %v1401 = vsub.f32 %v1265, %v1396
    %v1402 = vsub.f32 %v1266, %v1397
    %v1403 = vsel %vm1347, 1, 0
    %vm1404 = vcmp.eq.s32.totalorder %v1403, 1
    %v1405 = vsel %vm1404, %v1376, %v1398
    %v1406 = vsel %vm1404, %v1380, %v1399
    %v1407 = vsel %vm1404, %v1384, %v1400
    %v1408 = vsel %vm1404, %v1388, %v1401
    %v1409 = vsel %vm1404, %v1392, %v1402
    %v1410 = vlaneseq
    %v1411 = vshrl.u32 %v1410, 7
    %v1412 = vsub.s32 4, %v1411
    %v1413 = vrot.slane %v1342, %v1412
    %v1414 = vlaneseq
    %v1415 = vshrl.u32 %v1414, 7
    %v1416 = vsub.s32 4, %v1415
    %v1417 = vrot.slane %v1343, %v1416
    %v1418 = vlaneseq
    %v1419 = vshrl.u32 %v1418, 7
    %v1420 = vsub.s32 4, %v1419
    %v1421 = vrot.slane %v1344, %v1420
    %v1422 = vlaneseq
    %v1423 = vshrl.u32 %v1422, 7
    %v1424 = vsub.s32 4, %v1423
    %v1425 = vrot.slane %v1345, %v1424
    %v1426 = vlaneseq
    %v1427 = vshrl.u32 %v1426, 7
    %v1428 = vsub.s32 4, %v1427
    %v1429 = vrot.slane %v1346, %v1428
    %v1430 = vmul.f32 %v1351, %v1413
    %v1431 = vmul.f32 %v1356, %v1417
    %v1432 = vmul.f32 %v1361, %v1421
    %v1433 = vmul.f32 %v1366, %v1425
    %v1434 = vmul.f32 %v1371, %v1429
    %v1435 = vsub.f32 %v1297, %v1430
    %v1436 = vsub.f32 %v1298, %v1431
    %v1437 = vsub.f32 %v1299, %v1432
    %v1438 = vsub.f32 %v1300, %v1433
    %v1439 = vsub.f32 %v1301, %v1434
    %v1440 = vsel %vm1404, %v1413, %v1435
    %v1441 = vsel %vm1404, %v1417, %v1436
    %v1442 = vsel %vm1404, %v1421, %v1437
    %v1443 = vsel %vm1404, %v1425, %v1438
    %v1444 = vsel %vm1404, %v1429, %v1439
    %v1445 = vrcp.pop %v1405
    %v1446 = vmul.f32 1.0, %v1445
    %v1447 = vrcp.pop %v1406
    %v1448 = vmul.f32 1.0, %v1447
    %v1449 = vrcp.pop %v1407
    %v1450 = vmul.f32 1.0, %v1449
    %v1451 = vrcp.pop %v1408
    %v1452 = vmul.f32 1.0, %v1451
    %v1453 = vrcp.pop %v1409
    %v1454 = vmul.f32 1.0, %v1453
    %1456 = vset.pattern.permute.xlu0 5
    %1457 = vperm.xlu0 %1456, %v1446
    %v1458 = vpop.permute.xlu0 %1457
    %1461 = vset.pattern.permute.xlu0 5
    %1462 = vperm.xlu0 %1461, %v1448
    %v1463 = vpop.permute.xlu0 %1462
    %1466 = vset.pattern.permute.xlu0 5
    %1467 = vperm.xlu0 %1466, %v1450
    %v1468 = vpop.permute.xlu0 %1467
    %1471 = vset.pattern.permute.xlu0 5
    %1472 = vperm.xlu0 %1471, %v1452
    %v1473 = vpop.permute.xlu0 %1472
    %1476 = vset.pattern.permute.xlu0 5
    %1477 = vperm.xlu0 %1476, %v1454
    %v1478 = vpop.permute.xlu0 %1477
    %v1480 = vmul.f32 %v1405, %v1458
    %v1481 = vmul.f32 %v1406, %v1463
    %v1482 = vmul.f32 %v1407, %v1468
    %v1483 = vmul.f32 %v1408, %v1473
    %v1484 = vmul.f32 %v1409, %v1478
    %v1485 = vmul.f32 %v1440, %v1458
    %v1486 = vmul.f32 %v1441, %v1463
    %v1487 = vmul.f32 %v1442, %v1468
    %v1488 = vmul.f32 %v1443, %v1473
    %v1489 = vmul.f32 %v1444, %v1478
    %vm1490 = vcmp.eq.s32.totalorder %v337, 5
    %1492 = vset.pattern.permute.xlu0 5
    %1493 = vperm.xlu0 %1492, %v1405
    %v1494 = vpop.permute.xlu0 %1493
    %1497 = vset.pattern.permute.xlu0 5
    %1498 = vperm.xlu0 %1497, %v1406
    %v1499 = vpop.permute.xlu0 %1498
    %1502 = vset.pattern.permute.xlu0 5
    %1503 = vperm.xlu0 %1502, %v1407
    %v1504 = vpop.permute.xlu0 %1503
    %1507 = vset.pattern.permute.xlu0 5
    %1508 = vperm.xlu0 %1507, %v1408
    %v1509 = vpop.permute.xlu0 %1508
    %1512 = vset.pattern.permute.xlu0 5
    %1513 = vperm.xlu0 %1512, %v1409
    %v1514 = vpop.permute.xlu0 %1513
    %v1516 = vlaneseq
    %v1517 = vshrl.u32 %v1516, 7
    %v1518 = vsub.s32 5, %v1517
    %v1519 = vrot.slane %v1480, %v1518
    %v1520 = vlaneseq
    %v1521 = vshrl.u32 %v1520, 7
    %v1522 = vsub.s32 5, %v1521
    %v1523 = vrot.slane %v1481, %v1522
    %v1524 = vlaneseq
    %v1525 = vshrl.u32 %v1524, 7
    %v1526 = vsub.s32 5, %v1525
    %v1527 = vrot.slane %v1482, %v1526
    %v1528 = vlaneseq
    %v1529 = vshrl.u32 %v1528, 7
    %v1530 = vsub.s32 5, %v1529
    %v1531 = vrot.slane %v1483, %v1530
    %v1532 = vlaneseq
    %v1533 = vshrl.u32 %v1532, 7
    %v1534 = vsub.s32 5, %v1533
    %v1535 = vrot.slane %v1484, %v1534
    %v1536 = vmul.f32 %v1494, %v1519
    %v1537 = vmul.f32 %v1499, %v1523
    %v1538 = vmul.f32 %v1504, %v1527
    %v1539 = vmul.f32 %v1509, %v1531
    %v1540 = vmul.f32 %v1514, %v1535
    %v1541 = vsub.f32 %v1405, %v1536
    %v1542 = vsub.f32 %v1406, %v1537
    %v1543 = vsub.f32 %v1407, %v1538
    %v1544 = vsub.f32 %v1408, %v1539
    %v1545 = vsub.f32 %v1409, %v1540
    %v1546 = vsel %vm1490, 1, 0
    %vm1547 = vcmp.eq.s32.totalorder %v1546, 1
    %v1548 = vsel %vm1547, %v1519, %v1541
    %v1549 = vsel %vm1547, %v1523, %v1542
    %v1550 = vsel %vm1547, %v1527, %v1543
    %v1551 = vsel %vm1547, %v1531, %v1544
    %v1552 = vsel %vm1547, %v1535, %v1545
    %v1553 = vlaneseq
    %v1554 = vshrl.u32 %v1553, 7
    %v1555 = vsub.s32 5, %v1554
    %v1556 = vrot.slane %v1485, %v1555
    %v1557 = vlaneseq
    %v1558 = vshrl.u32 %v1557, 7
    %v1559 = vsub.s32 5, %v1558
    %v1560 = vrot.slane %v1486, %v1559
    %v1561 = vlaneseq
    %v1562 = vshrl.u32 %v1561, 7
    %v1563 = vsub.s32 5, %v1562
    %v1564 = vrot.slane %v1487, %v1563
    %v1565 = vlaneseq
    %v1566 = vshrl.u32 %v1565, 7
    %v1567 = vsub.s32 5, %v1566
    %v1568 = vrot.slane %v1488, %v1567
    %v1569 = vlaneseq
    %v1570 = vshrl.u32 %v1569, 7
    %v1571 = vsub.s32 5, %v1570
    %v1572 = vrot.slane %v1489, %v1571
    %v1573 = vmul.f32 %v1494, %v1556
    %v1574 = vmul.f32 %v1499, %v1560
    %v1575 = vmul.f32 %v1504, %v1564
    %v1576 = vmul.f32 %v1509, %v1568
    %v1577 = vmul.f32 %v1514, %v1572
    %v1578 = vsub.f32 %v1440, %v1573
    %v1579 = vsub.f32 %v1441, %v1574
    %v1580 = vsub.f32 %v1442, %v1575
    %v1581 = vsub.f32 %v1443, %v1576
    %v1582 = vsub.f32 %v1444, %v1577
    %v1583 = vsel %vm1547, %v1556, %v1578
    %v1584 = vsel %vm1547, %v1560, %v1579
    %v1585 = vsel %vm1547, %v1564, %v1580
    %v1586 = vsel %vm1547, %v1568, %v1581
    %v1587 = vsel %vm1547, %v1572, %v1582
    %v1588 = vrcp.pop %v1548
    %v1589 = vmul.f32 1.0, %v1588
    %v1590 = vrcp.pop %v1549
    %v1591 = vmul.f32 1.0, %v1590
    %v1592 = vrcp.pop %v1550
    %v1593 = vmul.f32 1.0, %v1592
    %v1594 = vrcp.pop %v1551
    %v1595 = vmul.f32 1.0, %v1594
    %v1596 = vrcp.pop %v1552
    %v1597 = vmul.f32 1.0, %v1596
    %1599 = vset.pattern.permute.xlu0 6
    %1600 = vperm.xlu0 %1599, %v1589
    %v1601 = vpop.permute.xlu0 %1600
    %1604 = vset.pattern.permute.xlu0 6
    %1605 = vperm.xlu0 %1604, %v1591
    %v1606 = vpop.permute.xlu0 %1605
    %1609 = vset.pattern.permute.xlu0 6
    %1610 = vperm.xlu0 %1609, %v1593
    %v1611 = vpop.permute.xlu0 %1610
    %1614 = vset.pattern.permute.xlu0 6
    %1615 = vperm.xlu0 %1614, %v1595
    %v1616 = vpop.permute.xlu0 %1615
    %1619 = vset.pattern.permute.xlu0 6
    %1620 = vperm.xlu0 %1619, %v1597
    %v1621 = vpop.permute.xlu0 %1620
    %v1623 = vmul.f32 %v1548, %v1601
    %v1624 = vmul.f32 %v1549, %v1606
    %v1625 = vmul.f32 %v1550, %v1611
    %v1626 = vmul.f32 %v1551, %v1616
    %v1627 = vmul.f32 %v1552, %v1621
    %v1628 = vmul.f32 %v1583, %v1601
    %v1629 = vmul.f32 %v1584, %v1606
    %v1630 = vmul.f32 %v1585, %v1611
    %v1631 = vmul.f32 %v1586, %v1616
    %v1632 = vmul.f32 %v1587, %v1621
    %vm1633 = vcmp.eq.s32.totalorder %v337, 6
    %1635 = vset.pattern.permute.xlu0 6
    %1636 = vperm.xlu0 %1635, %v1548
    %v1637 = vpop.permute.xlu0 %1636
    %1640 = vset.pattern.permute.xlu0 6
    %1641 = vperm.xlu0 %1640, %v1549
    %v1642 = vpop.permute.xlu0 %1641
    %1645 = vset.pattern.permute.xlu0 6
    %1646 = vperm.xlu0 %1645, %v1550
    %v1647 = vpop.permute.xlu0 %1646
    %1650 = vset.pattern.permute.xlu0 6
    %1651 = vperm.xlu0 %1650, %v1551
    %v1652 = vpop.permute.xlu0 %1651
    %1655 = vset.pattern.permute.xlu0 6
    %1656 = vperm.xlu0 %1655, %v1552
    %v1657 = vpop.permute.xlu0 %1656
    %v1659 = vlaneseq
    %v1660 = vshrl.u32 %v1659, 7
    %v1661 = vsub.s32 6, %v1660
    %v1662 = vrot.slane %v1623, %v1661
    %v1663 = vlaneseq
    %v1664 = vshrl.u32 %v1663, 7
    %v1665 = vsub.s32 6, %v1664
    %v1666 = vrot.slane %v1624, %v1665
    %v1667 = vlaneseq
    %v1668 = vshrl.u32 %v1667, 7
    %v1669 = vsub.s32 6, %v1668
    %v1670 = vrot.slane %v1625, %v1669
    %v1671 = vlaneseq
    %v1672 = vshrl.u32 %v1671, 7
    %v1673 = vsub.s32 6, %v1672
    %v1674 = vrot.slane %v1626, %v1673
    %v1675 = vlaneseq
    %v1676 = vshrl.u32 %v1675, 7
    %v1677 = vsub.s32 6, %v1676
    %v1678 = vrot.slane %v1627, %v1677
    %v1679 = vmul.f32 %v1637, %v1662
    %v1680 = vmul.f32 %v1642, %v1666
    %v1681 = vmul.f32 %v1647, %v1670
    %v1682 = vmul.f32 %v1652, %v1674
    %v1683 = vmul.f32 %v1657, %v1678
    %v1684 = vsub.f32 %v1548, %v1679
    %v1685 = vsub.f32 %v1549, %v1680
    %v1686 = vsub.f32 %v1550, %v1681
    %v1687 = vsub.f32 %v1551, %v1682
    %v1688 = vsub.f32 %v1552, %v1683
    %v1689 = vsel %vm1633, 1, 0
    %vm1690 = vcmp.eq.s32.totalorder %v1689, 1
    %v1691 = vsel %vm1690, %v1662, %v1684
    %v1692 = vsel %vm1690, %v1666, %v1685
    %v1693 = vsel %vm1690, %v1670, %v1686
    %v1694 = vsel %vm1690, %v1674, %v1687
    %v1695 = vsel %vm1690, %v1678, %v1688
    %v1696 = vlaneseq
    %v1697 = vshrl.u32 %v1696, 7
    %v1698 = vsub.s32 6, %v1697
    %v1699 = vrot.slane %v1628, %v1698
    %v1700 = vlaneseq
    %v1701 = vshrl.u32 %v1700, 7
    %v1702 = vsub.s32 6, %v1701
    %v1703 = vrot.slane %v1629, %v1702
    %v1704 = vlaneseq
    %v1705 = vshrl.u32 %v1704, 7
    %v1706 = vsub.s32 6, %v1705
    %v1707 = vrot.slane %v1630, %v1706
    %v1708 = vlaneseq
    %v1709 = vshrl.u32 %v1708, 7
    %v1710 = vsub.s32 6, %v1709
    %v1711 = vrot.slane %v1631, %v1710
    %v1712 = vlaneseq
    %v1713 = vshrl.u32 %v1712, 7
    %v1714 = vsub.s32 6, %v1713
    %v1715 = vrot.slane %v1632, %v1714
    %v1716 = vmul.f32 %v1637, %v1699
    %v1717 = vmul.f32 %v1642, %v1703
    %v1718 = vmul.f32 %v1647, %v1707
    %v1719 = vmul.f32 %v1652, %v1711
    %v1720 = vmul.f32 %v1657, %v1715
    %v1721 = vsub.f32 %v1583, %v1716
    %v1722 = vsub.f32 %v1584, %v1717
    %v1723 = vsub.f32 %v1585, %v1718
    %v1724 = vsub.f32 %v1586, %v1719
    %v1725 = vsub.f32 %v1587, %v1720
    %v1726 = vsel %vm1690, %v1699, %v1721
    %v1727 = vsel %vm1690, %v1703, %v1722
    %v1728 = vsel %vm1690, %v1707, %v1723
    %v1729 = vsel %vm1690, %v1711, %v1724
    %v1730 = vsel %vm1690, %v1715, %v1725
    %v1731 = vrcp.pop %v1691
    %v1732 = vmul.f32 1.0, %v1731
    %v1733 = vrcp.pop %v1692
    %v1734 = vmul.f32 1.0, %v1733
    %v1735 = vrcp.pop %v1693
    %v1736 = vmul.f32 1.0, %v1735
    %v1737 = vrcp.pop %v1694
    %v1738 = vmul.f32 1.0, %v1737
    %v1739 = vrcp.pop %v1695
    %v1740 = vmul.f32 1.0, %v1739
    %1742 = vset.pattern.permute.xlu0 7
    %1743 = vperm.xlu0 %1742, %v1732
    %v1744 = vpop.permute.xlu0 %1743
    %1747 = vset.pattern.permute.xlu0 7
    %1748 = vperm.xlu0 %1747, %v1734
    %v1749 = vpop.permute.xlu0 %1748
    %1752 = vset.pattern.permute.xlu0 7
    %1753 = vperm.xlu0 %1752, %v1736
    %v1754 = vpop.permute.xlu0 %1753
    %1757 = vset.pattern.permute.xlu0 7
    %1758 = vperm.xlu0 %1757, %v1738
    %v1759 = vpop.permute.xlu0 %1758
    %1762 = vset.pattern.permute.xlu0 7
    %1763 = vperm.xlu0 %1762, %v1740
    %v1764 = vpop.permute.xlu0 %1763
    %v1766 = vmul.f32 %v1726, %v1744
    %v1767 = vmul.f32 %v1727, %v1749
    %v1768 = vmul.f32 %v1728, %v1754
    %v1769 = vmul.f32 %v1729, %v1759
    %v1770 = vmul.f32 %v1730, %v1764
    %vm1771 = vcmp.eq.s32.totalorder %v337, 7
    %1773 = vset.pattern.permute.xlu0 7
    %1774 = vperm.xlu0 %1773, %v1691
    %v1775 = vpop.permute.xlu0 %1774
    %1778 = vset.pattern.permute.xlu0 7
    %1779 = vperm.xlu0 %1778, %v1692
    %v1780 = vpop.permute.xlu0 %1779
    %1783 = vset.pattern.permute.xlu0 7
    %1784 = vperm.xlu0 %1783, %v1693
    %v1785 = vpop.permute.xlu0 %1784
    %1788 = vset.pattern.permute.xlu0 7
    %1789 = vperm.xlu0 %1788, %v1694
    %v1790 = vpop.permute.xlu0 %1789
    %1793 = vset.pattern.permute.xlu0 7
    %1794 = vperm.xlu0 %1793, %v1695
    %v1795 = vpop.permute.xlu0 %1794
    %v1797 = vlaneseq
    %v1798 = vshrl.u32 %v1797, 7
    %v1799 = vsub.s32 7, %v1798
    %v1800 = vrot.slane %v1766, %v1799
    %v1801 = vlaneseq
    %v1802 = vshrl.u32 %v1801, 7
    %v1803 = vsub.s32 7, %v1802
    %v1804 = vrot.slane %v1767, %v1803
    %v1805 = vlaneseq
    %v1806 = vshrl.u32 %v1805, 7
    %v1807 = vsub.s32 7, %v1806
    %v1808 = vrot.slane %v1768, %v1807
    %v1809 = vlaneseq
    %v1810 = vshrl.u32 %v1809, 7
    %v1811 = vsub.s32 7, %v1810
    %v1812 = vrot.slane %v1769, %v1811
    %v1813 = vlaneseq
    %v1814 = vshrl.u32 %v1813, 7
    %v1815 = vsub.s32 7, %v1814
    %v1816 = vrot.slane %v1770, %v1815
    %v1817 = vmul.f32 %v1775, %v1800
    %v1818 = vmul.f32 %v1780, %v1804
    %v1819 = vmul.f32 %v1785, %v1808
    %v1820 = vmul.f32 %v1790, %v1812
    %v1821 = vmul.f32 %v1795, %v1816
    %v1822 = vsub.f32 %v1726, %v1817
    %v1823 = vsub.f32 %v1727, %v1818
    %v1824 = vsub.f32 %v1728, %v1819
    %v1825 = vsub.f32 %v1729, %v1820
    %v1826 = vsub.f32 %v1730, %v1821
    %v1827 = vsel %vm1771, 1, 0
    %vm1828 = vcmp.eq.s32.totalorder %v1827, 1
    %v1829 = vsel %vm1828, %v1800, %v1822
    %v1830 = vsel %vm1828, %v1804, %v1823
    %v1831 = vsel %vm1828, %v1808, %v1824
    %v1832 = vsel %vm1828, %v1812, %v1825
    %v1833 = vsel %vm1828, %v1816, %v1826
    %v1834 = vmul.f32 %v329, %v1829
    %v1835 = vsel %vm442, %v1834, 0.0
    %v1836 = vrot.slane %v1835, 4
    %v1837 = vadd.f32 %v1835, %v1836
    %v1838 = vrot.slane %v1837, 2
    %v1839 = vadd.f32 %v1837, %v1838
    %v1840 = vrot.slane %v1839, 1
    %v1841 = vadd.f32 %v1839, %v1840
    %v1842 = vmul.f32 %v329, %v1830
    %v1843 = vmul.f32 %v329, %v1831
    %v1844 = vmul.f32 %v329, %v1832
    %v1845 = vmul.f32 %v329, %v1833
    %v1846 = vsel %vm442, %v1842, 0.0
    %v1847 = vrot.slane %v1846, 4
    %v1848 = vadd.f32 %v1846, %v1847
    %v1849 = vrot.slane %v1848, 2
    %v1850 = vadd.f32 %v1848, %v1849
    %v1851 = vrot.slane %v1850, 1
    %v1852 = vadd.f32 %v1850, %v1851
    %v1853 = vsel %vm442, %v1843, 0.0
    %v1854 = vrot.slane %v1853, 4
    %v1855 = vadd.f32 %v1853, %v1854
    %v1856 = vrot.slane %v1855, 2
    %v1857 = vadd.f32 %v1855, %v1856
    %v1858 = vrot.slane %v1857, 1
    %v1859 = vadd.f32 %v1857, %v1858
    %v1860 = vsel %vm442, %v1844, 0.0
    %v1861 = vrot.slane %v1860, 4
    %v1862 = vadd.f32 %v1860, %v1861
    %v1863 = vrot.slane %v1862, 2
    %v1864 = vadd.f32 %v1862, %v1863
    %v1865 = vrot.slane %v1864, 1
    %v1866 = vadd.f32 %v1864, %v1865
    %v1867 = vsel %vm442, %v1845, 0.0
    %v1868 = vrot.slane %v1867, 4
    %v1869 = vadd.f32 %v1867, %v1868
    %v1870 = vrot.slane %v1869, 2
    %v1871 = vadd.f32 %v1869, %v1870
    %v1872 = vrot.slane %v1871, 1
    %v1873 = vadd.f32 %v1871, %v1872
    %v1876 = vunpack.c.l.s4 1966171168
    %v1877 = vunpack.c.0.s8 %v1876
    %v1878 = vlaneseq
    %v1879 = vshrl.u32 %v1878, 7
    %v1880 = vsub.s32 %v1877, %v1879
    %v1881 = vrot.slane %v392, %v1880
    %v1882 = vcombine.high %v1881, %v1881
    %v1884 = vunpack.c.l.s4 1966171168
    %v1885 = vunpack.c.0.s8 %v1884
    %v1886 = vlaneseq
    %v1887 = vshrl.u32 %v1886, 7
    %v1888 = vsub.s32 %v1885, %v1887
    %v1889 = vrot.slane %v1881, %v1888
    %v1891 = vunpack.c.l.s4 1966171168
    %v1892 = vunpack.c.0.s8 %v1891
    %v1893 = vlaneseq
    %v1894 = vshrl.u32 %v1893, 7
    %v1895 = vsub.s32 %v1892, %v1894
    %v1896 = vrot.slane %v1882, %v1895
    %v1897 = vcombine.high %v1889, %v1889
    %v1898 = vcombine.high %v1896, %v1896
    %v1899 = vlaneseq
    %v1900 = vshrl.u32 %v1899, 7
    %v1901 = vsub.s32 0, %v1900
    %v1902 = vrot.slane %v1889, %v1901
    %v1903 = vlaneseq
    %v1904 = vshrl.u32 %v1903, 7
    %v1905 = vsub.s32 0, %v1904
    %v1906 = vrot.slane %v1896, %v1905
    %v1907 = vlaneseq
    %v1908 = vshrl.u32 %v1907, 7
    %v1909 = vsub.s32 0, %v1908
    %v1910 = vrot.slane %v1897, %v1909
    %v1911 = vlaneseq
    %v1912 = vshrl.u32 %v1911, 7
    %v1913 = vsub.s32 0, %v1912
    %v1914 = vrot.slane %v1898, %v1913
    %v1919 = vmul.f32 %v1830, %v1902
    %v1920 = vmul.f32 %v1831, %v1906
    %v1921 = vmul.f32 %v1832, %v1910
    %v1922 = vmul.f32 %v1833, %v1914
    %v1923 = vsel %vm442, %v1919, 0.0
    %1924 = vadd.xlane.f32.xlu0 %v1923
    %v1925 = vpop.xlane.xlu0 %1924
    %v1926 = vsel %vm442, %v1920, 0.0
    %1927 = vadd.xlane.f32.xlu0 %v1926
    %v1928 = vpop.xlane.xlu0 %1927
    %v1929 = vsel %vm442, %v1921, 0.0
    %1930 = vadd.xlane.f32.xlu0 %v1929
    %v1931 = vpop.xlane.xlu0 %1930
    %v1932 = vsel %vm442, %v1922, 0.0
    %1933 = vadd.xlane.f32.xlu0 %v1932
    %v1934 = vpop.xlane.xlu0 %1933
    %v1935 = vmul.f32 %v1925, %v329
    %v1936 = vmul.f32 %v1928, %v329
    %v1937 = vmul.f32 %v1931, %v329
    %v1938 = vmul.f32 %v1934, %v329
    %v1939 = vsel %vm442, %v1935, 0.0
    %v1940 = vrot.slane %v1939, 4
    %v1941 = vadd.f32 %v1939, %v1940
    %v1942 = vrot.slane %v1941, 2
    %v1943 = vadd.f32 %v1941, %v1942
    %v1944 = vrot.slane %v1943, 1
    %v1945 = vadd.f32 %v1943, %v1944
    %v1946 = vsel %vm442, %v1936, 0.0
    %v1947 = vrot.slane %v1946, 4
    %v1948 = vadd.f32 %v1946, %v1947
    %v1949 = vrot.slane %v1948, 2
    %v1950 = vadd.f32 %v1948, %v1949
    %v1951 = vrot.slane %v1950, 1
    %v1952 = vadd.f32 %v1950, %v1951
    %v1953 = vsel %vm442, %v1937, 0.0
    %v1954 = vrot.slane %v1953, 4
    %v1955 = vadd.f32 %v1953, %v1954
    %v1956 = vrot.slane %v1955, 2
    %v1957 = vadd.f32 %v1955, %v1956
    %v1958 = vrot.slane %v1957, 1
    %v1959 = vadd.f32 %v1957, %v1958
    %v1960 = vsel %vm442, %v1938, 0.0
    %v1961 = vrot.slane %v1960, 4
    %v1962 = vadd.f32 %v1960, %v1961
    %v1963 = vrot.slane %v1962, 2
    %v1964 = vadd.f32 %v1962, %v1963
    %v1965 = vrot.slane %v1964, 1
    %v1966 = vadd.f32 %v1964, %v1965
    %v1967 = vmul.f32 %v408, %v1945
    %v1968 = vmul.f32 %v408, %v1952
    %v1969 = vmul.f32 %v408, %v1959
    %v1970 = vmul.f32 %v408, %v1966
    %v1971 = vsub.f32 %v311, %v1841
    %vm1976 = vcmask 1041409
    %v1977 = vsel %vm1976, %v1859, %v1852
    %vm1978 = vcmask 1042434
    %v1979 = vsel %vm1978, %v1866, %v1977
    %vm1980 = vcmask 1043459
    %v1981 = vsel %vm1980, %v1873, %v1979
    %v1983 = vadd.f32 %v1971, %v1981
    %v1988 = vsel %vm1976, %v1968, %v1967
    %v1989 = vsel %vm1978, %v1969, %v1988
    %v1990 = vsel %vm1980, %v1970, %v1989
    %1992 = vxpose.xlu0.b32.start [1/16] %v1990, 128
    %1993 = vxpose.xlu0.b32.cont [2/16] 0.0, 128
    %1994 = vxpose.xlu0.b32.cont [3/16] 0.0, 128
    %1995 = vxpose.xlu0.b32.cont [4/16] 0.0, 128
    %1996 = vxpose.xlu0.b32.cont [5/16] 0.0, 128
    %1997 = vxpose.xlu0.b32.cont [6/16] 0.0, 128
    %1998 = vxpose.xlu0.b32.cont [7/16] 0.0, 128
    %1999 = vxpose.xlu0.b32.cont [8/16] 0.0, 128
    %2000 = vxpose.xlu0.b32.cont [9/16] 0.0, 128
    %2001 = vxpose.xlu0.b32.cont [10/16] 0.0, 128
    %2002 = vxpose.xlu0.b32.cont [11/16] 0.0, 128
    %2003 = vxpose.xlu0.b32.cont [12/16] 0.0, 128
    %2004 = vxpose.xlu0.b32.cont [13/16] 0.0, 128
    %2005 = vxpose.xlu0.b32.cont [14/16] 0.0, 128
    %2006 = vxpose.xlu0.b32.cont [15/16] 0.0, 128
    %2007 = vxpose.xlu0.b32.end [16/16] 0.0, 128
    %v2008 = vpop.trf.xlu0
    %v2009 = vpop.trf.xlu0
    %v2010 = vpop.trf.xlu0
    %v2011 = vpop.trf.xlu0
    %v2012 = vpop.trf.xlu0
    %v2013 = vpop.trf.xlu0
    %v2014 = vpop.trf.xlu0
    %v2015 = vpop.trf.xlu0
    %v2016 = vpop.trf.xlu0
    %v2017 = vpop.trf.xlu0
    %v2018 = vpop.trf.xlu0
    %v2019 = vpop.trf.xlu0
    %v2020 = vpop.trf.xlu0
    %v2021 = vpop.trf.xlu0
    %v2022 = vpop.trf.xlu0
    %v2023 = vpop.trf.xlu0
    %2024 = vxpose.xlu0.b32.start [1/16] %v1983, 128
    %2025 = vxpose.xlu0.b32.cont [2/16] 0.0, 128
    %2026 = vxpose.xlu0.b32.cont [3/16] 0.0, 128
    %2027 = vxpose.xlu0.b32.cont [4/16] 0.0, 128
    %2028 = vxpose.xlu0.b32.cont [5/16] 0.0, 128
    %2029 = vxpose.xlu0.b32.cont [6/16] 0.0, 128
    %2030 = vxpose.xlu0.b32.cont [7/16] 0.0, 128
    %2031 = vxpose.xlu0.b32.cont [8/16] 0.0, 128
    %2032 = vxpose.xlu0.b32.cont [9/16] 0.0, 128
    %2033 = vxpose.xlu0.b32.cont [10/16] 0.0, 128
    %2034 = vxpose.xlu0.b32.cont [11/16] 0.0, 128
    %2035 = vxpose.xlu0.b32.cont [12/16] 0.0, 128
    %2036 = vxpose.xlu0.b32.cont [13/16] 0.0, 128
    %2037 = vxpose.xlu0.b32.cont [14/16] 0.0, 128
    %2038 = vxpose.xlu0.b32.cont [15/16] 0.0, 128
    %2039 = vxpose.xlu0.b32.end [16/16] 0.0, 128
    %v2040 = vpop.trf.xlu0
    %v2041 = vpop.trf.xlu0
    %v2042 = vpop.trf.xlu0
    %v2043 = vpop.trf.xlu0
    %v2044 = vpop.trf.xlu0
    %v2045 = vpop.trf.xlu0
    %v2046 = vpop.trf.xlu0
    %v2047 = vpop.trf.xlu0
    %v2048 = vpop.trf.xlu0
    %v2049 = vpop.trf.xlu0
    %v2050 = vpop.trf.xlu0
    %v2051 = vpop.trf.xlu0
    %v2052 = vpop.trf.xlu0
    %v2053 = vpop.trf.xlu0
    %v2054 = vpop.trf.xlu0
    %v2055 = vpop.trf.xlu0
    %vm2056 = vcmask 31744
    %2057 = vst.msk [vmem:[%s15] sm:$0xff] %vm2056, %v2008
    %2058 = vst.msk [vmem:[%s16] sm:$0xff] %vm2056, %v2040
    %v2059 = vmax.f32 %v2040, 0.0001
    %v2060 = vmin.f32 %v2059, 1000.0
    %v2061 = vrsqrt.pop %v2060
    %v2062 = vmul.f32 %v2060, %v2061
    %vm2063 = vcmp.eq.f32.partialorder %v2060, inf
    %v2064 = vsel %vm2063, %v2060, %v2062
    %vm2065 = vcmp.eq.f32.partialorder %v2060, 0.0
    %v2066 = vand.u32 %v2060, 2147483648
    %v2067 = vsel %vm2065, %v2066, %v2064
    %v2068 = vld [vmem:[%s10] sm:$0xf]
    %v2069 = vld [vmem:[%s11] sm:$0x1]
    %v2070 = vld [vmem:[%s12] sm:$0xff]
    %v2071 = vld [vmem:[%s12 + $0x8] sm:$0xff]
    %v2072 = vld [vmem:[%s12 + $0x10] sm:$0xff]
    %v2073 = vld [vmem:[%s12 + $0x18] sm:$0xff]
    %v2074 = vld [vmem:[%s12 + $0x20] sm:$0xff]
    %v2075 = vld [vmem:[%s12 + $0x28] sm:$0xff]
    %v2076 = vld [vmem:[%s12 + $0x30] sm:$0xff]
    %v2077 = vld [vmem:[%s12 + $0x38] sm:$0xff]
    %v2078 = vld [vmem:[%s13] sm:$0x3]
    %v2079 = vld [vmem:[%s14] sm:$0xff]
    %v2080 = vmul.f32 %v2067, %v2079
    %v2081 = vadd.f32 %v2008, %v2080
    %v2083 = vlaneseq
    %v2084 = vshrl.u32 %v2083, 7
    %v2085 = vsub.s32 0, %v2084
    %v2086 = vrot.slane %v2069, %v2085
    %v2089 = vsel %vm2056, %v2081, 0
    %vm2091 = vcmask 1043456
    %v2093 = vsel %vm2091, %v2068, 0
    %2095 = vmatprep.subr.mxu0 0.0
    %2096 = vmatpush1.msra.mxu0 %v2093
    %2097 = vmatprep.subr.mxu0 0.0
    %2098 = vmatpush1.msra.mxu0 0.0
    %2099 = vmatprep.subr.mxu0 0.0
    %2100 = vmatpush1.msra.mxu0 0.0
    %2101 = vmatprep.subr.mxu0 0.0
    %2102 = vmatpush1.msra.mxu0 0.0
    %2103 = vmatprep.subr.mxu0 0.0
    %2104 = vmatpush1.msra.mxu0 0.0
    %2105 = vmatprep.subr.mxu0 0.0
    %2106 = vmatpush1.msra.mxu0 0.0
    %2107 = vmatprep.subr.mxu0 0.0
    %2108 = vmatpush1.msra.mxu0 0.0
    %2109 = vmatprep.subr.mxu0 0.0
    %2110 = vmatpush1.msra.mxu0 0.0
    %2111 = vmatprep.subr.mxu0 0.0
    %2112 = vmatpush1.msra.mxu0 0.0
    %2113 = vmatprep.subr.mxu0 0.0
    %2114 = vmatpush1.msra.mxu0 0.0
    %2115 = vmatprep.subr.mxu0 0.0
    %2116 = vmatpush1.msra.mxu0 0.0
    %2117 = vmatprep.subr.mxu0 0.0
    %2118 = vmatpush1.msra.mxu0 0.0
    %2119 = vmatprep.subr.mxu0 0.0
    %2120 = vmatpush1.msra.mxu0 0.0
    %2121 = vmatprep.subr.mxu0 0.0
    %2122 = vmatpush1.msra.mxu0 0.0
    %2123 = vmatprep.subr.mxu0 0.0
    %2124 = vmatpush1.msra.mxu0 0.0
    %2125 = vmatprep.subr.mxu0 0.0
    %2126 = vmatpush1.msra.mxu0 0.0
    %2127 = vmatprep.subr.mxu0 0.0
    %2128 = vmatpush1.msra.mxu0 0.0
    %2129 = vmatprep.subr.mxu0 0.0
    %2130 = vmatpush1.msra.mxu0 0.0
    %2131 = vmatprep.subr.mxu0 0.0
    %2132 = vmatpush1.msra.mxu0 0.0
    %2133 = vmatprep.subr.mxu0 0.0
    %2134 = vmatpush1.msra.mxu0 0.0
    %2135 = vmatprep.subr.mxu0 0.0
    %2136 = vmatpush1.msra.mxu0 0.0
    %2137 = vmatprep.subr.mxu0 0.0
    %2138 = vmatpush1.msra.mxu0 0.0
    %2139 = vmatprep.subr.mxu0 0.0
    %2140 = vmatpush1.msra.mxu0 0.0
    %2141 = vmatprep.subr.mxu0 0.0
    %2142 = vmatpush1.msra.mxu0 0.0
    %2143 = vmatprep.subr.mxu0 0.0
    %2144 = vmatpush1.msra.mxu0 0.0
    %2145 = vmatprep.subr.mxu0 0.0
    %2146 = vmatpush1.msra.mxu0 0.0
    %2147 = vmatprep.subr.mxu0 0.0
    %2148 = vmatpush1.msra.mxu0 0.0
    %2149 = vmatprep.subr.mxu0 0.0
    %2150 = vmatpush1.msra.mxu0 0.0
    %2151 = vmatprep.subr.mxu0 0.0
    %2152 = vmatpush1.msra.mxu0 0.0
    %2153 = vmatprep.subr.mxu0 0.0
    %2154 = vmatpush1.msra.mxu0 0.0
    %2155 = vmatprep.subr.mxu0 0.0
    %2156 = vmatpush1.msra.mxu0 0.0
    %2157 = vmatprep.subr.mxu0 0.0
    %2158 = vmatpush1.msra.mxu0 0.0
    %2159 = vmatprep.mubr.f32.mxu0 0.0
    %2160 = vmatmul.mubr.f32.gmra.mrb[0].mxu0 %v2089
    %v2161 = vpop.f32.mrb[0].mxu0
    %v2162 = vadd.f32 %v2086, %v2161
    %v2163 = vpop.f32.mrb[0].mxu0
    %2164 = vdwg.mxu0
    %v2165 = vtanh.pop %v2162
    %v2167 = vlaneseq
    %v2168 = vshrl.u32 %v2167, 7
    %v2169 = vsub.s32 0, %v2168
    %v2170 = vrot.slane %v2078, %v2169
    %v2171 = vlaneseq
    %v2172 = vshrl.u32 %v2171, 7
    %v2173 = vsub.s32 1, %v2172
    %v2174 = vrot.slane %v2078, %v2173
    %v2178 = vsel %vm198, %v2165, 0
    %2180 = vmatprep.subr.mxu0 %v2071
    %2181 = vmatpush1.msra.mxu0 %v2070
    %2182 = vmatprep.subr.mxu0 %v2073
    %2183 = vmatpush1.msra.mxu0 %v2072
    %2184 = vmatprep.subr.mxu0 %v2075
    %2185 = vmatpush1.msra.mxu0 %v2074
    %2186 = vmatprep.subr.mxu0 %v2077
    %2187 = vmatpush1.msra.mxu0 %v2076
    %2188 = vmatprep.subr.mxu0 0.0
    %2189 = vmatpush1.msra.mxu0 0.0
    %2190 = vmatprep.subr.mxu0 0.0
    %2191 = vmatpush1.msra.mxu0 0.0
    %2192 = vmatprep.subr.mxu0 0.0
    %2193 = vmatpush1.msra.mxu0 0.0
    %2194 = vmatprep.subr.mxu0 0.0
    %2195 = vmatpush1.msra.mxu0 0.0
    %2196 = vmatprep.subr.mxu0 0.0
    %2197 = vmatpush1.msra.mxu0 0.0
    %2198 = vmatprep.subr.mxu0 0.0
    %2199 = vmatpush1.msra.mxu0 0.0
    %2200 = vmatprep.subr.mxu0 0.0
    %2201 = vmatpush1.msra.mxu0 0.0
    %2202 = vmatprep.subr.mxu0 0.0
    %2203 = vmatpush1.msra.mxu0 0.0
    %2204 = vmatprep.subr.mxu0 0.0
    %2205 = vmatpush1.msra.mxu0 0.0
    %2206 = vmatprep.subr.mxu0 0.0
    %2207 = vmatpush1.msra.mxu0 0.0
    %2208 = vmatprep.subr.mxu0 0.0
    %2209 = vmatpush1.msra.mxu0 0.0
    %2210 = vmatprep.subr.mxu0 0.0
    %2211 = vmatpush1.msra.mxu0 0.0
    %2212 = vmatprep.subr.mxu0 0.0
    %2213 = vmatpush1.msra.mxu0 0.0
    %2214 = vmatprep.subr.mxu0 0.0
    %2215 = vmatpush1.msra.mxu0 0.0
    %2216 = vmatprep.subr.mxu0 0.0
    %2217 = vmatpush1.msra.mxu0 0.0
    %2218 = vmatprep.subr.mxu0 0.0
    %2219 = vmatpush1.msra.mxu0 0.0
    %2220 = vmatprep.subr.mxu0 0.0
    %2221 = vmatpush1.msra.mxu0 0.0
    %2222 = vmatprep.subr.mxu0 0.0
    %2223 = vmatpush1.msra.mxu0 0.0
    %2224 = vmatprep.subr.mxu0 0.0
    %2225 = vmatpush1.msra.mxu0 0.0
    %2226 = vmatprep.subr.mxu0 0.0
    %2227 = vmatpush1.msra.mxu0 0.0
    %2228 = vmatprep.subr.mxu0 0.0
    %2229 = vmatpush1.msra.mxu0 0.0
    %2230 = vmatprep.subr.mxu0 0.0
    %2231 = vmatpush1.msra.mxu0 0.0
    %2232 = vmatprep.subr.mxu0 0.0
    %2233 = vmatpush1.msra.mxu0 0.0
    %2234 = vmatprep.subr.mxu0 0.0
    %2235 = vmatpush1.msra.mxu0 0.0
    %2236 = vmatprep.subr.mxu0 0.0
    %2237 = vmatpush1.msra.mxu0 0.0
    %2238 = vmatprep.subr.mxu0 0.0
    %2239 = vmatpush1.msra.mxu0 0.0
    %2240 = vmatprep.subr.mxu0 0.0
    %2241 = vmatpush1.msra.mxu0 0.0
    %2242 = vmatprep.subr.mxu0 0.0
    %2243 = vmatpush1.msra.mxu0 0.0
    %2244 = vmatprep.mubr.f32.mxu0 0.0
    %2245 = vmatmul.mubr.f32.gmra.mrb[0].mxu0 %v2178
    %v2246 = vpop.f32.mrb[0].mxu0
    %v2247 = vadd.f32 %v2170, %v2246
    %v2248 = vpop.f32.mrb[0].mxu0
    %v2249 = vadd.f32 %v2174, %v2248
    %2250 = vdwg.mxu0
    %v2251 = vsub.f32 0.0, %v2247
    %v2252 = vsub.f32 0.0, %v2249
    %v2253 = vmul.f32 %v2251, 1.442695
    %v2254 = vpow.pop %v2253
    %v2255 = vmul.f32 %v2252, 1.442695
    %v2256 = vpow.pop %v2255
    %v2257 = vadd.f32 %v2254, 1.0
    %v2258 = vadd.f32 %v2256, 1.0
    %v2259 = vrcp.pop %v2257
    %v2260 = vrcp.pop %v2258
    %2261 = vst [vmem:[#allocation5] sm:$0xff] %v2259
    %2262 = vst [vmem:[#allocation5 + $0x8] sm:$0xff] %v2260
    // Predicated region
    $region66: #{tpu_custom_call.1} parent=1 // pred_check
      _
    $region67: #{tpu_custom_call.1} parent=1 // pred_check_branch
      %2264 = sbr.rel (0) target = $region69
    $region68: #{tpu_custom_call.1} parent=1 // pred_region
      _
    $region69: #{tpu_custom_call.1} parent=1 // pred_fallthru
      _
    // Predicated region
    $region70: #{tpu_custom_call.1} parent=1 // pred_check
      _
    $region71: #{tpu_custom_call.1} parent=1 // pred_check_branch
      %2266 = sbr.rel (0) target = $region73
    $region72: #{tpu_custom_call.1} parent=1 // pred_region
      _
    $region73: #{tpu_custom_call.1} parent=1 // pred_fallthru
      _
    // Predicated region
    $region74: #{tpu_custom_call.1} parent=1 // pred_check
      _
    $region75: #{tpu_custom_call.1} parent=1 // pred_check_branch
      %2268 = sbr.rel (0) target = $region77
    $region76: #{tpu_custom_call.1} parent=1 // pred_region
      %s2270 = ssub.s32 256, 256
      %2271 = vsyncadd [#allocation3], %s2270
      %s2273 = sshll.u32 [#allocation5], 4
      %s2274 = int_to_ptr.vmem [resolvable:$true] %s2273
      %2276 = dma.vmem_to_hbm [thread:$0]  %s2274, 256, %s17, [#allocation3]
    $region77: #{tpu_custom_call.1} parent=1 // pred_fallthru
      _
    // Predicated region
    $region78: #{tpu_custom_call.1} parent=1 // pred_check
      _
    $region79: #{tpu_custom_call.1} parent=1 // pred_check_branch
      %2278 = sbr.rel (0) target = $region81
    $region80: #{tpu_custom_call.1} parent=1 // pred_region
      _
    $region81: #{tpu_custom_call.1} parent=1 // pred_fallthru
      _
    // Predicated region
    $region82: #{tpu_custom_call.1} parent=1 // pred_check
      _
    $region83: #{tpu_custom_call.1} parent=1 // pred_check_branch
      %2280 = sbr.rel (0) target = $region85
    $region84: #{tpu_custom_call.1} parent=1 // pred_region
      _
    $region85: #{tpu_custom_call.1} parent=1 // pred_fallthru
      _
    // Predicated region
    $region86: #{tpu_custom_call.1} parent=1 // pred_check
      _
    $region87: #{tpu_custom_call.1} parent=1 // pred_check_branch
      %2282 = sbr.rel (0) target = $region89
    $region88: #{tpu_custom_call.1} parent=1 // pred_region
      %2283 = dma.done [#allocation3], 256
    $region89: #{tpu_custom_call.1} parent=1 // pred_fallthru
      _
    %2284 = vsyncpa [#allocation3], 1
    %2285 = vsyncpa [#allocation4], 1

</llo_original>
